<compile_context>
chip_gen: v7x
topology: tpu7x:2x2x1
jax: 0.10.0
libtpu: 0.0.40
codegen_flags: <defaults>
</compile_context>

<pallas_src>
import functools

import jax
import jax.numpy as jnp
from jax.experimental import pallas as pl
from jax.experimental.pallas import tpu as pltpu


def _round_up(x, m):
    return ((x + m - 1) // m) * m


def _multitask_fnn_kernel(
    emb_ref,      # [TB, emb_dim]   polymer embedding tile
    feats_ref,    # [TB, 2]         raw polymer feats tile (scaling folded into W_A_feat)
    wAe_ref,      # [emb_dim, S+H]  [w1_emb | w_di1_emb]
    wAf_ref,      # [2, S+H]        feature rows of [w1 | w_di1], pre-divided by scaling
    bA_ref,       # [1, S+H]        [b1 | b_di1]
    wB_ref,       # [S, 3H]         [w_sa1 | w_rg1 | w_re1_shared]
    bB_ref,       # [1, 3H]         [b_sa1 | b_rg1 | b_re1]
    wx_ref,       # [1, 2H]         [w_di1_x | w_re1_x]  (rank-1 rows of the concat inputs)
    wC_ref,       # [2H, 2]         block-diag([w_sa2[:,0], w_rg2[:,0]])
    bC_ref,       # [1, 2]          [b_sa2[0], b_rg2[0]]
    wOut_ref,     # [4H, 6]         block matrix -> output in final column order
    bOut_ref,     # [1, 6]          [b_rg2 | b_di2 | b_sa2 | b_re2]
    out_ref,      # [TB, 6]
    *, S, H,
):
    f32 = jnp.float32
    emb = emb_ref[...].astype(f32)
    feats = feats_ref[...].astype(f32)
    wAf = wAf_ref[...]

    # Phase A: everything driven by the (implicitly concatenated) input x.
    #   pre_A[:, :S]   = x @ w1    + b1
    #   pre_A[:, S:]   = x @ w_di1 + b_di1     (ReLU deferred until rank-1 add)
    # The 2 normalized-feature columns are applied as VPU rank-1 updates.
    pre_a = (
        jnp.dot(emb, wAe_ref[...], preferred_element_type=f32)
        + feats[:, 0:1] * wAf[0:1, :]
        + feats[:, 1:2] * wAf[1:2, :]
        + bA_ref[...]
    )
    shared = jnp.maximum(pre_a[:, :S], 0.0)          # shared_repr (ReLU, dropout=id)
    di_pre = pre_a[:, S:S + H]                       # diffusion head layer-1 pre-act

    # Phase B: everything driven by shared_repr, in one matmul.
    pre_b = jnp.dot(shared, wB_ref[...], preferred_element_type=f32) + bB_ref[...]
    h_sarg = jnp.maximum(pre_b[:, :2 * H], 0.0)      # [h_sa | h_rg] contiguous
    re_pre = pre_b[:, 2 * H:3 * H]                   # ree head layer-1 pre-act

    # Phase C: the two scalars the later heads depend on (sasa[:,0], log_rg[:,0]).
    c = jnp.dot(h_sarg, wC_ref[...], preferred_element_type=f32) + bC_ref[...]

    # Rank-1 updates for the concat-augmented inputs, then ReLU (VPU work).
    wx = wx_ref[...]
    h_di = jnp.maximum(di_pre + c[:, 0:1] * wx[:, :H], 0.0)
    h_re = jnp.maximum(re_pre + c[:, 1:2] * wx[:, H:2 * H], 0.0)

    # Final fused output matmul: columns already in [log_rg, log_diff, sasa, log_ree]
    # order, so no in-kernel concatenate of lane-sparse pieces is needed.
    out = (
        jnp.dot(h_sarg, wOut_ref[0:2 * H, :], preferred_element_type=f32)
        + jnp.dot(h_di, wOut_ref[2 * H:3 * H, :], preferred_element_type=f32)
        + jnp.dot(h_re, wOut_ref[3 * H:4 * H, :], preferred_element_type=f32)
        + bOut_ref[...]
    )
    out_ref[...] = out.astype(out_ref.dtype)


def init_params(key, input_dim, shared_layer_dim, hidden_dim):
    """Deterministic parameter init. Weights are stored [in, out]; biases [1, out]."""
    def lin(k, fan_in, fan_out):
        kw, kb = jax.random.split(k)
        lim = 1.0 / jnp.sqrt(jnp.float32(fan_in))
        w = jax.random.uniform(kw, (fan_in, fan_out), jnp.float32, -lim, lim)
        b = jax.random.uniform(kb, (1, fan_out), jnp.float32, -lim, lim)
        return w, b

    keys = jax.random.split(key, 9)
    p = {}
    p["w1"], p["b1"] = lin(keys[0], input_dim, shared_layer_dim)
    p["w_sa1"], p["b_sa1"] = lin(keys[1], shared_layer_dim, hidden_dim)
    p["w_sa2"], p["b_sa2"] = lin(keys[2], hidden_dim, 2)
    p["w_rg1"], p["b_rg1"] = lin(keys[3], shared_layer_dim, hidden_dim)
    p["w_rg2"], p["b_rg2"] = lin(keys[4], hidden_dim, 2)
    p["w_re1_full"], p["b_re1"] = lin(keys[5], shared_layer_dim + 1, hidden_dim)
    p["w_re2"], p["b_re2"] = lin(keys[6], hidden_dim, 1)
    p["w_di1_full"], p["b_di1"] = lin(keys[7], input_dim + 1, hidden_dim)
    p["w_di2"], p["b_di2"] = lin(keys[8], hidden_dim, 1)
    return p


def _pack_weights(params, emb_dim, n_feats):
    """Pack the 20 per-layer tensors into 10 block-structured arrays (f32)."""
    scaling = jnp.array([10.0, 290.0], dtype=jnp.float32)

    S = params["w1"].shape[1]
    H = params["w_sa1"].shape[1]
    input_dim = emb_dim + n_feats

    w1 = params["w1"]                      # [input_dim, S]
    w_di1_full = params["w_di1_full"]      # [input_dim + 1, H]
    w_re1_full = params["w_re1_full"]      # [S + 1, H]

    # Phase A: everything consuming the combined input x.
    wA_emb = jnp.concatenate([w1[:emb_dim], w_di1_full[:emb_dim]], axis=1)       # [emb_dim, S+H]
    wA_feat = jnp.concatenate(
        [w1[emb_dim:input_dim], w_di1_full[emb_dim:input_dim]], axis=1
    ) / scaling[:, None]                                                         # [2, S+H]
    bA = jnp.concatenate([params["b1"], params["b_di1"]], axis=1)                # [1, S+H]

    # Phase B: everything consuming shared_repr.
    wB = jnp.concatenate([params["w_sa1"], params["w_rg1"], w_re1_full[:S]], axis=1)  # [S, 3H]
    bB = jnp.concatenate([params["b_sa1"], params["b_rg1"], params["b_re1"]], axis=1)  # [1, 3H]

    # Rank-1 rows for the concat-augmented inputs (sasa[:,0] and log_rg[:,0]).
    wx = jnp.concatenate([w_di1_full[input_dim:input_dim + 1],
                          w_re1_full[S:S + 1]], axis=1)                          # [1, 2H]

    # Phase C: only the columns needed for the sequential dependency.
    zH1 = jnp.zeros((H, 1), jnp.float32)
    wC = jnp.concatenate(
        [jnp.concatenate([params["w_sa2"][:, 0:1], zH1], axis=1),   # rows 0:H  <- h_sa
         jnp.concatenate([zH1, params["w_rg2"][:, 0:1]], axis=1)],  # rows H:2H <- h_rg
        axis=0,
    )                                                                            # [2H, 2]
    bC = jnp.concatenate([params["b_sa2"][:, 0:1], params["b_rg2"][:, 0:1]], axis=1)  # [1, 2]

    # Final output block matrix: [h_sa | h_rg | h_di | h_re] @ wOut + bOut
    # produces columns in order [log_rg(2), log_diffusion(1), sasa(2), log_ree(1)].
    wOut = jnp.concatenate(
        [
            jnp.concatenate([jnp.zeros((H, 3), jnp.float32), params["w_sa2"],
                             jnp.zeros((H, 1), jnp.float32)], axis=1),   # h_sa -> sasa cols 3:5
            jnp.concatenate([params["w_rg2"],
                             jnp.zeros((H, 4), jnp.float32)], axis=1),   # h_rg -> log_rg cols 0:2
            jnp.concatenate([jnp.zeros((H, 2), jnp.float32), params["w_di2"],
                             jnp.zeros((H, 3), jnp.float32)], axis=1),   # h_di -> log_diff col 2
            jnp.concatenate([jnp.zeros((H, 5), jnp.float32),
                             params["w_re2"]], axis=1),                  # h_re -> log_ree col 5
        ],
        axis=0,
    )                                                                            # [4H, 6]
    bOut = jnp.concatenate(
        [params["b_rg2"], params["b_di2"], params["b_sa2"], params["b_re2"]], axis=1
    )                                                                            # [1, 6]

    packed = (wA_emb, wA_feat, bA, wB, bB, wx, wC, bC, wOut, bOut)
    return packed, S, H


@functools.partial(jax.jit, static_argnames=("block_b",))
def polymer_multitask_fnn(polymer_embedding, polymer_feats, params, *, block_b=512):
    B, emb_dim = polymer_embedding.shape
    n_feats = polymer_feats.shape[-1]
    assert n_feats == 2, "module defines exactly 2 scaling factors"

    packed, S, H = _pack_weights(params, emb_dim, n_feats)

    # Batch tile: large (amortize ~0.35us/step), multiple of 8, but never larger
    # than the (8-rounded) batch so tiny batches don't pay huge padding.
    bb = max(8, min(_round_up(block_b, 8), _round_up(B, 8)))
    grid = (pl.cdiv(B, bb),)

    emb_spec = pl.BlockSpec((bb, emb_dim), lambda i: (i, 0))
    feat_spec = pl.BlockSpec((bb, n_feats), lambda i: (i, 0))
    w_specs = [pl.BlockSpec(w.shape, lambda i: (0, 0)) for w in packed]
    out_spec = pl.BlockSpec((bb, 6), lambda i: (i, 0))

    out = pl.pallas_call(
        functools.partial(_multitask_fnn_kernel, S=S, H=H),
        out_shape=jax.ShapeDtypeStruct((B, 6), jnp.float32),
        grid_spec=pltpu.PrefetchScalarGridSpec(
            num_scalar_prefetch=0,
            grid=grid,
            in_specs=[emb_spec, feat_spec] + w_specs,
            out_specs=out_spec,
        ),
        compiler_params=pltpu.CompilerParams(
            dimension_semantics=("parallel",),   # shards batch across TCs on v7x
        ),
    )(polymer_embedding.astype(jnp.float32), polymer_feats.astype(jnp.float32),
      *packed)
    return out


def reference_forward(polymer_embedding, polymer_feats, params):
    """Pure-JAX reference mirroring the PyTorch forward (eval mode)."""
    scaling = jnp.array([10.0, 290.0], dtype=jnp.float32)
    normed = polymer_feats / scaling
    combined = jnp.concatenate([polymer_embedding, normed], axis=-1)

    def lin(x, w, b):
        return x @ w + b

    shared = jax.nn.relu(lin(combined, params["w1"], params["b1"]))
    sasa = lin(jax.nn.relu(lin(shared, params["w_sa1"], params["b_sa1"])),
               params["w_sa2"], params["b_sa2"])
    log_rg = lin(jax.nn.relu(lin(shared, params["w_rg1"], params["b_rg1"])),
                 params["w_rg2"], params["b_rg2"])
    diff_in = jnp.concatenate([combined, sasa[:, 0:1]], axis=-1)
    log_diff = lin(jax.nn.relu(lin(diff_in, params["w_di1_full"], params["b_di1"])),
                   params["w_di2"], params["b_di2"])
    ree_in = jnp.concatenate([shared, log_rg[:, 0:1]], axis=-1)
    log_ree = lin(jax.nn.relu(lin(ree_in, params["w_re1_full"], params["b_re1"])),
                  params["w_re2"], params["b_re2"])
    return jnp.concatenate([log_rg, log_diff, sasa, log_ree], axis=-1)


if __name__ == "__main__":
    B = 256
    emb_dim = 30
    n_feats = 2
    input_dim = emb_dim + n_feats      # 32
    shared_layer_dim = 64
    hidden_dim = 32

    key = jax.random.PRNGKey(0)
    k_emb, k_feat, k_params = jax.random.split(key, 3)

    polymer_embedding = jax.random.normal(k_emb, (B, emb_dim), jnp.float32)
    polymer_feats = jax.random.uniform(
        k_feat, (B, n_feats), jnp.float32, 0.5, 300.0
    )
    params = init_params(k_params, input_dim, shared_layer_dim, hidden_dim)

    # block_b=128 -> grid of 2 (exercises the batch tiling / parallel grid axis).
    out = polymer_multitask_fnn(polymer_embedding, polymer_feats, params, block_b=128)
    out = jax.block_until_ready(out)

    ref = reference_forward(polymer_embedding, polymer_feats, params)
    assert out.shape == (B, 6), out.shape
    max_err = float(jnp.max(jnp.abs(out - ref)))
    assert jnp.allclose(out, ref, atol=1e-4, rtol=1e-4), (
        "mismatch vs reference: max abs err = %e" % max_err
    )
    print("KERNEL_OK")
</pallas_src>

<mosaic_0001>
module attributes {stable_mosaic.version = 11 : i64} {
  func.func @_multitask_fnn_kernel(%arg0: i32, %arg1: memref<128x30xf32, #tpu.memory_space<vmem>>, %arg2: memref<128x2xf32, #tpu.memory_space<vmem>>, %arg3: memref<30x96xf32, #tpu.memory_space<vmem>>, %arg4: memref<2x96xf32, #tpu.memory_space<vmem>>, %arg5: memref<1x96xf32, #tpu.memory_space<vmem>>, %arg6: memref<64x96xf32, #tpu.memory_space<vmem>>, %arg7: memref<1x96xf32, #tpu.memory_space<vmem>>, %arg8: memref<1x64xf32, #tpu.memory_space<vmem>>, %arg9: memref<64x2xf32, #tpu.memory_space<vmem>>, %arg10: memref<1x2xf32, #tpu.memory_space<vmem>>, %arg11: memref<128x6xf32, #tpu.memory_space<vmem>>, %arg12: memref<1x6xf32, #tpu.memory_space<vmem>>, %arg13: memref<128x6xf32, #tpu.memory_space<vmem>>) attributes {dimension_semantics = [#tpu.dimension_semantics<parallel>], iteration_bounds = array<i64: 2>, scalar_prefetch = 0 : i64, scratch_operands = 0 : i64, tpu.core_type = #tpu.core_type<tc>, window_params = [{transform_indices = @transform_0, window_bounds = array<i64: 128, 30>}, {transform_indices = @transform_1, window_bounds = array<i64: 128, 2>}, {pipeline_mode = #tpu.pipeline_mode<synchronous>, transform_indices = @transform_2, window_bounds = array<i64: 30, 96>}, {pipeline_mode = #tpu.pipeline_mode<synchronous>, transform_indices = @transform_3, window_bounds = array<i64: 2, 96>}, {pipeline_mode = #tpu.pipeline_mode<synchronous>, transform_indices = @transform_4, window_bounds = array<i64: 1, 96>}, {pipeline_mode = #tpu.pipeline_mode<synchronous>, transform_indices = @transform_5, window_bounds = array<i64: 64, 96>}, {pipeline_mode = #tpu.pipeline_mode<synchronous>, transform_indices = @transform_6, window_bounds = array<i64: 1, 96>}, {pipeline_mode = #tpu.pipeline_mode<synchronous>, transform_indices = @transform_7, window_bounds = array<i64: 1, 64>}, {pipeline_mode = #tpu.pipeline_mode<synchronous>, transform_indices = @transform_8, window_bounds = array<i64: 64, 2>}, {pipeline_mode = #tpu.pipeline_mode<synchronous>, transform_indices = @transform_9, window_bounds = array<i64: 1, 2>}, {pipeline_mode = #tpu.pipeline_mode<synchronous>, transform_indices = @transform_10, window_bounds = array<i64: 128, 6>}, {pipeline_mode = #tpu.pipeline_mode<synchronous>, transform_indices = @transform_11, window_bounds = array<i64: 1, 6>}, {transform_indices = @transform_12, window_bounds = array<i64: 128, 6>}]} {
    %c0 = arith.constant 0 : index
    %c0_0 = arith.constant 0 : index
    %0 = vector.load %arg1[%c0, %c0_0] : memref<128x30xf32, #tpu.memory_space<vmem>>, vector<128x30xf32>
    %c0_1 = arith.constant 0 : index
    %c0_2 = arith.constant 0 : index
    %1 = vector.load %arg2[%c0_1, %c0_2] : memref<128x2xf32, #tpu.memory_space<vmem>>, vector<128x2xf32>
    %c0_3 = arith.constant 0 : index
    %c0_4 = arith.constant 0 : index
    %2 = vector.load %arg4[%c0_3, %c0_4] : memref<2x96xf32, #tpu.memory_space<vmem>>, vector<2x96xf32>
    %c0_5 = arith.constant 0 : index
    %c0_6 = arith.constant 0 : index
    %3 = vector.load %arg3[%c0_5, %c0_6] : memref<30x96xf32, #tpu.memory_space<vmem>>, vector<30x96xf32>
    %cst = arith.constant dense<0.000000e+00> : vector<128x96xf32>
    %4 = tpu.matmul %0, %3, %cst {dimension_numbers = #tpu.dot_dimension_numbers<[1], [0], [0], [1], [0, 0, 1, 1], [], []>} : vector<128x30xf32>, vector<30x96xf32>, vector<128x96xf32> -> vector<128x96xf32>
    %5 = vector.extract_strided_slice %1 {offsets = [0, 0], sizes = [128, 1], strides = [1, 1]} : vector<128x2xf32> to vector<128x1xf32>
    %6 = vector.extract_strided_slice %2 {offsets = [0, 0], sizes = [1, 96], strides = [1, 1]} : vector<2x96xf32> to vector<1x96xf32>
    %7 = vector.broadcast %5 : vector<128x1xf32> to vector<128x96xf32>
    %8 = vector.broadcast %6 : vector<1x96xf32> to vector<128x96xf32>
    %9 = arith.mulf %7, %8 : vector<128x96xf32>
    %10 = arith.addf %4, %9 : vector<128x96xf32>
    %11 = vector.extract_strided_slice %1 {offsets = [0, 1], sizes = [128, 1], strides = [1, 1]} : vector<128x2xf32> to vector<128x1xf32>
    %12 = vector.extract_strided_slice %2 {offsets = [1, 0], sizes = [1, 96], strides = [1, 1]} : vector<2x96xf32> to vector<1x96xf32>
    %13 = vector.broadcast %11 : vector<128x1xf32> to vector<128x96xf32>
    %14 = vector.broadcast %12 : vector<1x96xf32> to vector<128x96xf32>
    %15 = arith.mulf %13, %14 : vector<128x96xf32>
    %16 = arith.addf %10, %15 : vector<128x96xf32>
    %c0_7 = arith.constant 0 : index
    %c0_8 = arith.constant 0 : index
    %17 = vector.load %arg5[%c0_7, %c0_8] : memref<1x96xf32, #tpu.memory_space<vmem>>, vector<1x96xf32>
    %18 = vector.broadcast %17 : vector<1x96xf32> to vector<128x96xf32>
    %19 = arith.addf %16, %18 : vector<128x96xf32>
    %20 = vector.extract_strided_slice %19 {offsets = [0, 0], sizes = [128, 64], strides = [1, 1]} : vector<128x96xf32> to vector<128x64xf32>
    %cst_9 = arith.constant 0.000000e+00 : f32
    %21 = vector.broadcast %cst_9 : f32 to vector<128x64xf32>
    %22 = arith.maximumf %20, %21 : vector<128x64xf32>
    %23 = vector.extract_strided_slice %19 {offsets = [0, 64], sizes = [128, 32], strides = [1, 1]} : vector<128x96xf32> to vector<128x32xf32>
    %c0_10 = arith.constant 0 : index
    %c0_11 = arith.constant 0 : index
    %24 = vector.load %arg6[%c0_10, %c0_11] : memref<64x96xf32, #tpu.memory_space<vmem>>, vector<64x96xf32>
    %cst_12 = arith.constant dense<0.000000e+00> : vector<128x96xf32>
    %25 = tpu.matmul %22, %24, %cst_12 {dimension_numbers = #tpu.dot_dimension_numbers<[1], [0], [0], [1], [0, 0, 1, 1], [], []>} : vector<128x64xf32>, vector<64x96xf32>, vector<128x96xf32> -> vector<128x96xf32>
    %c0_13 = arith.constant 0 : index
    %c0_14 = arith.constant 0 : index
    %26 = vector.load %arg7[%c0_13, %c0_14] : memref<1x96xf32, #tpu.memory_space<vmem>>, vector<1x96xf32>
    %27 = vector.broadcast %26 : vector<1x96xf32> to vector<128x96xf32>
    %28 = arith.addf %25, %27 : vector<128x96xf32>
    %29 = vector.extract_strided_slice %28 {offsets = [0, 0], sizes = [128, 64], strides = [1, 1]} : vector<128x96xf32> to vector<128x64xf32>
    %cst_15 = arith.constant 0.000000e+00 : f32
    %30 = vector.broadcast %cst_15 : f32 to vector<128x64xf32>
    %31 = arith.maximumf %29, %30 : vector<128x64xf32>
    %32 = vector.extract_strided_slice %28 {offsets = [0, 64], sizes = [128, 32], strides = [1, 1]} : vector<128x96xf32> to vector<128x32xf32>
    %c0_16 = arith.constant 0 : index
    %c0_17 = arith.constant 0 : index
    %33 = vector.load %arg9[%c0_16, %c0_17] : memref<64x2xf32, #tpu.memory_space<vmem>>, vector<64x2xf32>
    %cst_18 = arith.constant dense<0.000000e+00> : vector<128x2xf32>
    %34 = tpu.matmul %31, %33, %cst_18 {dimension_numbers = #tpu.dot_dimension_numbers<[1], [0], [0], [1], [0, 0, 1, 1], [], []>} : vector<128x64xf32>, vector<64x2xf32>, vector<128x2xf32> -> vector<128x2xf32>
    %c0_19 = arith.constant 0 : index
    %c0_20 = arith.constant 0 : index
    %35 = vector.load %arg10[%c0_19, %c0_20] : memref<1x2xf32, #tpu.memory_space<vmem>>, vector<1x2xf32>
    %36 = vector.broadcast %35 : vector<1x2xf32> to vector<128x2xf32>
    %37 = arith.addf %34, %36 : vector<128x2xf32>
    %c0_21 = arith.constant 0 : index
    %c0_22 = arith.constant 0 : index
    %38 = vector.load %arg8[%c0_21, %c0_22] : memref<1x64xf32, #tpu.memory_space<vmem>>, vector<1x64xf32>
    %39 = vector.extract_strided_slice %37 {offsets = [0, 0], sizes = [128, 1], strides = [1, 1]} : vector<128x2xf32> to vector<128x1xf32>
    %40 = vector.extract_strided_slice %38 {offsets = [0, 0], sizes = [1, 32], strides = [1, 1]} : vector<1x64xf32> to vector<1x32xf32>
    %41 = vector.broadcast %39 : vector<128x1xf32> to vector<128x32xf32>
    %42 = vector.broadcast %40 : vector<1x32xf32> to vector<128x32xf32>
    %43 = arith.mulf %41, %42 : vector<128x32xf32>
    %44 = arith.addf %23, %43 : vector<128x32xf32>
    %cst_23 = arith.constant 0.000000e+00 : f32
    %45 = vector.broadcast %cst_23 : f32 to vector<128x32xf32>
    %46 = arith.maximumf %44, %45 : vector<128x32xf32>
    %47 = vector.extract_strided_slice %37 {offsets = [0, 1], sizes = [128, 1], strides = [1, 1]} : vector<128x2xf32> to vector<128x1xf32>
    %48 = vector.extract_strided_slice %38 {offsets = [0, 32], sizes = [1, 32], strides = [1, 1]} : vector<1x64xf32> to vector<1x32xf32>
    %49 = vector.broadcast %47 : vector<128x1xf32> to vector<128x32xf32>
    %50 = vector.broadcast %48 : vector<1x32xf32> to vector<128x32xf32>
    %51 = arith.mulf %49, %50 : vector<128x32xf32>
    %52 = arith.addf %32, %51 : vector<128x32xf32>
    %cst_24 = arith.constant 0.000000e+00 : f32
    %53 = vector.broadcast %cst_24 : f32 to vector<128x32xf32>
    %54 = arith.maximumf %52, %53 : vector<128x32xf32>
    %c0_25 = arith.constant 0 : index
    %c0_26 = arith.constant 0 : index
    %55 = vector.load %arg11[%c0_25, %c0_26] : memref<128x6xf32, #tpu.memory_space<vmem>>, vector<64x6xf32>
    %cst_27 = arith.constant dense<0.000000e+00> : vector<128x6xf32>
    %56 = tpu.matmul %31, %55, %cst_27 {dimension_numbers = #tpu.dot_dimension_numbers<[1], [0], [0], [1], [0, 0, 1, 1], [], []>} : vector<128x64xf32>, vector<64x6xf32>, vector<128x6xf32> -> vector<128x6xf32>
    %c64 = arith.constant 64 : index
    %c0_28 = arith.constant 0 : index
    %57 = vector.load %arg11[%c64, %c0_28] : memref<128x6xf32, #tpu.memory_space<vmem>>, vector<32x6xf32>
    %cst_29 = arith.constant dense<0.000000e+00> : vector<128x6xf32>
    %58 = tpu.matmul %46, %57, %cst_29 {dimension_numbers = #tpu.dot_dimension_numbers<[1], [0], [0], [1], [0, 0, 1, 1], [], []>} : vector<128x32xf32>, vector<32x6xf32>, vector<128x6xf32> -> vector<128x6xf32>
    %59 = arith.addf %56, %58 : vector<128x6xf32>
    %c96 = arith.constant 96 : index
    %c0_30 = arith.constant 0 : index
    %60 = vector.load %arg11[%c96, %c0_30] : memref<128x6xf32, #tpu.memory_space<vmem>>, vector<32x6xf32>
    %cst_31 = arith.constant dense<0.000000e+00> : vector<128x6xf32>
    %61 = tpu.matmul %54, %60, %cst_31 {dimension_numbers = #tpu.dot_dimension_numbers<[1], [0], [0], [1], [0, 0, 1, 1], [], []>} : vector<128x32xf32>, vector<32x6xf32>, vector<128x6xf32> -> vector<128x6xf32>
    %62 = arith.addf %59, %61 : vector<128x6xf32>
    %c0_32 = arith.constant 0 : index
    %c0_33 = arith.constant 0 : index
    %63 = vector.load %arg12[%c0_32, %c0_33] : memref<1x6xf32, #tpu.memory_space<vmem>>, vector<1x6xf32>
    %64 = vector.broadcast %63 : vector<1x6xf32> to vector<128x6xf32>
    %65 = arith.addf %62, %64 : vector<128x6xf32>
    %c0_34 = arith.constant 0 : index
    %c0_35 = arith.constant 0 : index
    %66 = vector.load %arg13[%c0_34, %c0_35] : memref<128x6xf32, #tpu.memory_space<vmem>>, vector<128x6xf32>
    tpu.vector_store %arg13[%c0_34, %c0_35], %65 {strides = array<i32>} : memref<128x6xf32, #tpu.memory_space<vmem>>, vector<128x6xf32>,
    return
  }
  func.func @transform_0(%arg0: i32) -> (i32, i32) {
    %c0_i32 = arith.constant 0 : i32
    %c0_i32_0 = arith.constant 0 : i32
    return %arg0, %c0_i32 : i32, i32
  }
  func.func @transform_1(%arg0: i32) -> (i32, i32) {
    %c0_i32 = arith.constant 0 : i32
    %c0_i32_0 = arith.constant 0 : i32
    return %arg0, %c0_i32 : i32, i32
  }
  func.func @transform_2(%arg0: i32) -> (i32, i32) {
    %c0_i32 = arith.constant 0 : i32
    %c0_i32_0 = arith.constant 0 : i32
    %c0_i32_1 = arith.constant 0 : i32
    return %c0_i32, %c0_i32_0 : i32, i32
  }
  func.func @transform_3(%arg0: i32) -> (i32, i32) {
    %c0_i32 = arith.constant 0 : i32
    %c0_i32_0 = arith.constant 0 : i32
    %c0_i32_1 = arith.constant 0 : i32
    return %c0_i32, %c0_i32_0 : i32, i32
  }
  func.func @transform_4(%arg0: i32) -> (i32, i32) {
    %c0_i32 = arith.constant 0 : i32
    %c0_i32_0 = arith.constant 0 : i32
    %c0_i32_1 = arith.constant 0 : i32
    return %c0_i32, %c0_i32_0 : i32, i32
  }
  func.func @transform_5(%arg0: i32) -> (i32, i32) {
    %c0_i32 = arith.constant 0 : i32
    %c0_i32_0 = arith.constant 0 : i32
    %c0_i32_1 = arith.constant 0 : i32
    return %c0_i32, %c0_i32_0 : i32, i32
  }
  func.func @transform_6(%arg0: i32) -> (i32, i32) {
    %c0_i32 = arith.constant 0 : i32
    %c0_i32_0 = arith.constant 0 : i32
    %c0_i32_1 = arith.constant 0 : i32
    return %c0_i32, %c0_i32_0 : i32, i32
  }
  func.func @transform_7(%arg0: i32) -> (i32, i32) {
    %c0_i32 = arith.constant 0 : i32
    %c0_i32_0 = arith.constant 0 : i32
    %c0_i32_1 = arith.constant 0 : i32
    return %c0_i32, %c0_i32_0 : i32, i32
  }
  func.func @transform_8(%arg0: i32) -> (i32, i32) {
    %c0_i32 = arith.constant 0 : i32
    %c0_i32_0 = arith.constant 0 : i32
    %c0_i32_1 = arith.constant 0 : i32
    return %c0_i32, %c0_i32_0 : i32, i32
  }
  func.func @transform_9(%arg0: i32) -> (i32, i32) {
    %c0_i32 = arith.constant 0 : i32
    %c0_i32_0 = arith.constant 0 : i32
    %c0_i32_1 = arith.constant 0 : i32
    return %c0_i32, %c0_i32_0 : i32, i32
  }
  func.func @transform_10(%arg0: i32) -> (i32, i32) {
    %c0_i32 = arith.constant 0 : i32
    %c0_i32_0 = arith.constant 0 : i32
    %c0_i32_1 = arith.constant 0 : i32
    return %c0_i32, %c0_i32_0 : i32, i32
  }
  func.func @transform_11(%arg0: i32) -> (i32, i32) {
    %c0_i32 = arith.constant 0 : i32
    %c0_i32_0 = arith.constant 0 : i32
    %c0_i32_1 = arith.constant 0 : i32
    return %c0_i32, %c0_i32_0 : i32, i32
  }
  func.func @transform_12(%arg0: i32) -> (i32, i32) {
    %c0_i32 = arith.constant 0 : i32
    %c0_i32_0 = arith.constant 0 : i32
    return %arg0, %c0_i32 : i32, i32
  }
}

</mosaic_0001>

<llo_original>
// kernel: polymer_multitask_fnn.1
$region0: #{polymer_multitask_fnn.1}
  #allocation0 [shape = 'u32[]', space=smem, size = 0x4, offset = 0x4, fixed_abs, tag = 'smem constant byte address 0x4 - core index']
  #allocation1 [shape = 'u32[144,128]{1,0:T(1,128)}', space=vmem, size = 0x12000, scoped, tag = 'internal scratch']
  %s0 = inlined_call_operand.vmem [shape: f32[256,30], index: 0, kind: input, shape index: {}]
  %s1 = inlined_call_operand.vmem [shape: f32[256,2], index: 1, kind: input, shape index: {}]
  %s2 = inlined_call_operand.vmem [shape: f32[30,96], index: 2, kind: input, shape index: {}]
  %s3 = inlined_call_operand.vmem [shape: f32[2,96], index: 3, kind: input, shape index: {}]
  %s4 = inlined_call_operand.vmem [shape: f32[1,96], index: 4, kind: input, shape index: {}]
  %s5 = inlined_call_operand.vmem [shape: f32[64,96], index: 5, kind: input, shape index: {}]
  %s6 = inlined_call_operand.vmem [shape: f32[1,96], index: 6, kind: input, shape index: {}]
  %s7 = inlined_call_operand.vmem [shape: f32[1,64], index: 7, kind: input, shape index: {}]
  %s8 = inlined_call_operand.vmem [shape: f32[64,2], index: 8, kind: input, shape index: {}]
  %s9 = inlined_call_operand.vmem [shape: f32[1,2], index: 9, kind: input, shape index: {}]
  %s10 = inlined_call_operand.vmem [shape: f32[128,6], index: 10, kind: input, shape index: {}]
  %s11 = inlined_call_operand.vmem [shape: f32[1,6], index: 11, kind: input, shape index: {}]
  %s12 = inlined_call_operand.vmem [shape: f32[256,6], index: 12, kind: output, shape index: {}]
  %s13 = sld [smem:[#allocation0]]
  $region81: #{polymer_multitask_fnn.1} parent=0
    _
  %s15 = ssub.s32 1, %s13
  %s16 = scalar_select 0, %s15, %s13
  loop: start=0, step=1, limit=4
  $region2: #{polymer_multitask_fnn.1} parent=0 // loop_pre_header
    _
  $region3: #{polymer_multitask_fnn.1} parent=0 // loop_header
    %s18 = sphi 0, %s22
    %p19 = scmp.ge.s32.totalorder %s18, 4
    %s28 = sphi 0, %s30
    %s31 = sphi 0, %s28
    %s32 = sphi 0, %s31
    %s48 = sphi 0, %s32
    %s54 = sphi 0, %s56
    %s57 = sphi 0, %s54
    %s58 = sphi 0, %s57
    %s74 = sphi 0, %s58
    %s78 = sphi 0, %s78
    %s80 = sphi 0, %s78
    %s81 = sphi 0, %s80
    %s95 = sphi 0, %s81
    %s99 = sphi 0, %s99
    %s101 = sphi 0, %s99
    %s102 = sphi 0, %s101
    %s116 = sphi 0, %s102
    %s120 = sphi 0, %s120
    %s122 = sphi 0, %s120
    %s123 = sphi 0, %s122
    %s137 = sphi 0, %s123
    %s141 = sphi 0, %s141
    %s143 = sphi 0, %s141
    %s144 = sphi 0, %s143
    %s158 = sphi 0, %s144
    %s162 = sphi 0, %s162
    %s164 = sphi 0, %s162
    %s165 = sphi 0, %s164
    %s179 = sphi 0, %s165
    %s183 = sphi 0, %s183
    %s185 = sphi 0, %s183
    %s186 = sphi 0, %s185
    %s200 = sphi 0, %s186
    %s204 = sphi 0, %s204
    %s206 = sphi 0, %s204
    %s207 = sphi 0, %s206
    %s221 = sphi 0, %s207
    %s225 = sphi 0, %s225
    %s227 = sphi 0, %s225
    %s228 = sphi 0, %s227
    %s242 = sphi 0, %s228
    %s246 = sphi 0, %s246
    %s248 = sphi 0, %s246
    %s249 = sphi 0, %s248
    %s263 = sphi 0, %s249
    %s267 = sphi 0, %s267
    %s269 = sphi 0, %s267
    %s270 = sphi 0, %s269
    %s284 = sphi 0, %s270
    %s290 = sphi 0, %s292
    %s293 = sphi 0, %s290
    %s294 = sphi 0, %s293
    %s310 = sphi 0, %s294
  $region4: #{polymer_multitask_fnn.1} parent=0 // loop_header_branch
    %21 = sbr.rel (%p19) target = $region8
  $region5: #{polymer_multitask_fnn.1} parent=0 // loop_body
    %s23 = ssub.s32 %s18, 1
    %s24 = ssub.s32 %s18, 2
    %s25 = sadd.s32 %s18, 1
    %s26 = ssub.s32 %s18, %s25
    %p27 = scmp.eq.s32.totalorder %s26, 0
    %s29 = sadd.s32 %s28, 1
    %s30 = scalar_select %p27, %s28, %s29
    %p33 = pneg %p27
    %p34 = scmp.eq.s32.totalorder %s18, 1
    %p35 = por %p33, %p34
    %p36 = scmp.ne.s32.totalorder %s28, %s31
    %p37 = scmp.eq.s32.totalorder %s18, 0
    %p38 = por %p36, %p37
    %p39 = scmp.ne.s32.totalorder %s28, %s31
    %p40 = scmp.eq.s32.totalorder %s23, 1
    %p41 = por %p39, %p40
    %p42 = scmp.ne.s32.totalorder %s31, %s32
    %p43 = scmp.eq.s32.totalorder %s23, 0
    %p44 = por %p42, %p43
    %p45 = scmp.ne.s32.totalorder %s31, %s32
    %p46 = scmp.eq.s32.totalorder %s24, 1
    %p47 = por %p45, %p46
    %p49 = scmp.ne.s32.totalorder %s32, %s48
    %p50 = scmp.eq.s32.totalorder %s24, 0
    %p51 = por %p49, %p50
    %s52 = ssub.s32 %s18, %s25
    %p53 = scmp.eq.s32.totalorder %s52, 0
    %s55 = sadd.s32 %s54, 1
    %s56 = scalar_select %p53, %s54, %s55
    %p59 = pneg %p53
    %p60 = scmp.eq.s32.totalorder %s18, 1
    %p61 = por %p59, %p60
    %p62 = scmp.ne.s32.totalorder %s54, %s57
    %p63 = scmp.eq.s32.totalorder %s18, 0
    %p64 = por %p62, %p63
    %p65 = scmp.ne.s32.totalorder %s54, %s57
    %p66 = scmp.eq.s32.totalorder %s23, 1
    %p67 = por %p65, %p66
    %p68 = scmp.ne.s32.totalorder %s57, %s58
    %p69 = scmp.eq.s32.totalorder %s23, 0
    %p70 = por %p68, %p69
    %p71 = scmp.ne.s32.totalorder %s57, %s58
    %p72 = scmp.eq.s32.totalorder %s24, 1
    %p73 = por %p71, %p72
    %p75 = scmp.ne.s32.totalorder %s58, %s74
    %p76 = scmp.eq.s32.totalorder %s24, 0
    %p77 = por %p75, %p76
    %s79 = sadd.s32 %s78, 1
    %p82 = scmp.eq.s32.totalorder %s18, 1
    %p83 = scmp.ne.s32.totalorder %s78, %s80
    %p84 = scmp.eq.s32.totalorder %s18, 0
    %p85 = por %p83, %p84
    %p86 = scmp.ne.s32.totalorder %s78, %s80
    %p87 = scmp.eq.s32.totalorder %s23, 1
    %p88 = por %p86, %p87
    %p89 = scmp.ne.s32.totalorder %s80, %s81
    %p90 = scmp.eq.s32.totalorder %s23, 0
    %p91 = por %p89, %p90
    %p92 = scmp.ne.s32.totalorder %s80, %s81
    %p93 = scmp.eq.s32.totalorder %s24, 1
    %p94 = por %p92, %p93
    %p96 = scmp.ne.s32.totalorder %s81, %s95
    %p97 = scmp.eq.s32.totalorder %s24, 0
    %p98 = por %p96, %p97
    %s100 = sadd.s32 %s99, 1
    %p103 = scmp.eq.s32.totalorder %s18, 1
    %p104 = scmp.ne.s32.totalorder %s99, %s101
    %p105 = scmp.eq.s32.totalorder %s18, 0
    %p106 = por %p104, %p105
    %p107 = scmp.ne.s32.totalorder %s99, %s101
    %p108 = scmp.eq.s32.totalorder %s23, 1
    %p109 = por %p107, %p108
    %p110 = scmp.ne.s32.totalorder %s101, %s102
    %p111 = scmp.eq.s32.totalorder %s23, 0
    %p112 = por %p110, %p111
    %p113 = scmp.ne.s32.totalorder %s101, %s102
    %p114 = scmp.eq.s32.totalorder %s24, 1
    %p115 = por %p113, %p114
    %p117 = scmp.ne.s32.totalorder %s102, %s116
    %p118 = scmp.eq.s32.totalorder %s24, 0
    %p119 = por %p117, %p118
    %s121 = sadd.s32 %s120, 1
    %p124 = scmp.eq.s32.totalorder %s18, 1
    %p125 = scmp.ne.s32.totalorder %s120, %s122
    %p126 = scmp.eq.s32.totalorder %s18, 0
    %p127 = por %p125, %p126
    %p128 = scmp.ne.s32.totalorder %s120, %s122
    %p129 = scmp.eq.s32.totalorder %s23, 1
    %p130 = por %p128, %p129
    %p131 = scmp.ne.s32.totalorder %s122, %s123
    %p132 = scmp.eq.s32.totalorder %s23, 0
    %p133 = por %p131, %p132
    %p134 = scmp.ne.s32.totalorder %s122, %s123
    %p135 = scmp.eq.s32.totalorder %s24, 1
    %p136 = por %p134, %p135
    %p138 = scmp.ne.s32.totalorder %s123, %s137
    %p139 = scmp.eq.s32.totalorder %s24, 0
    %p140 = por %p138, %p139
    %s142 = sadd.s32 %s141, 1
    %p145 = scmp.eq.s32.totalorder %s18, 1
    %p146 = scmp.ne.s32.totalorder %s141, %s143
    %p147 = scmp.eq.s32.totalorder %s18, 0
    %p148 = por %p146, %p147
    %p149 = scmp.ne.s32.totalorder %s141, %s143
    %p150 = scmp.eq.s32.totalorder %s23, 1
    %p151 = por %p149, %p150
    %p152 = scmp.ne.s32.totalorder %s143, %s144
    %p153 = scmp.eq.s32.totalorder %s23, 0
    %p154 = por %p152, %p153
    %p155 = scmp.ne.s32.totalorder %s143, %s144
    %p156 = scmp.eq.s32.totalorder %s24, 1
    %p157 = por %p155, %p156
    %p159 = scmp.ne.s32.totalorder %s144, %s158
    %p160 = scmp.eq.s32.totalorder %s24, 0
    %p161 = por %p159, %p160
    %s163 = sadd.s32 %s162, 1
    %p166 = scmp.eq.s32.totalorder %s18, 1
    %p167 = scmp.ne.s32.totalorder %s162, %s164
    %p168 = scmp.eq.s32.totalorder %s18, 0
    %p169 = por %p167, %p168
    %p170 = scmp.ne.s32.totalorder %s162, %s164
    %p171 = scmp.eq.s32.totalorder %s23, 1
    %p172 = por %p170, %p171
    %p173 = scmp.ne.s32.totalorder %s164, %s165
    %p174 = scmp.eq.s32.totalorder %s23, 0
    %p175 = por %p173, %p174
    %p176 = scmp.ne.s32.totalorder %s164, %s165
    %p177 = scmp.eq.s32.totalorder %s24, 1
    %p178 = por %p176, %p177
    %p180 = scmp.ne.s32.totalorder %s165, %s179
    %p181 = scmp.eq.s32.totalorder %s24, 0
    %p182 = por %p180, %p181
    %s184 = sadd.s32 %s183, 1
    %p187 = scmp.eq.s32.totalorder %s18, 1
    %p188 = scmp.ne.s32.totalorder %s183, %s185
    %p189 = scmp.eq.s32.totalorder %s18, 0
    %p190 = por %p188, %p189
    %p191 = scmp.ne.s32.totalorder %s183, %s185
    %p192 = scmp.eq.s32.totalorder %s23, 1
    %p193 = por %p191, %p192
    %p194 = scmp.ne.s32.totalorder %s185, %s186
    %p195 = scmp.eq.s32.totalorder %s23, 0
    %p196 = por %p194, %p195
    %p197 = scmp.ne.s32.totalorder %s185, %s186
    %p198 = scmp.eq.s32.totalorder %s24, 1
    %p199 = por %p197, %p198
    %p201 = scmp.ne.s32.totalorder %s186, %s200
    %p202 = scmp.eq.s32.totalorder %s24, 0
    %p203 = por %p201, %p202
    %s205 = sadd.s32 %s204, 1
    %p208 = scmp.eq.s32.totalorder %s18, 1
    %p209 = scmp.ne.s32.totalorder %s204, %s206
    %p210 = scmp.eq.s32.totalorder %s18, 0
    %p211 = por %p209, %p210
    %p212 = scmp.ne.s32.totalorder %s204, %s206
    %p213 = scmp.eq.s32.totalorder %s23, 1
    %p214 = por %p212, %p213
    %p215 = scmp.ne.s32.totalorder %s206, %s207
    %p216 = scmp.eq.s32.totalorder %s23, 0
    %p217 = por %p215, %p216
    %p218 = scmp.ne.s32.totalorder %s206, %s207
    %p219 = scmp.eq.s32.totalorder %s24, 1
    %p220 = por %p218, %p219
    %p222 = scmp.ne.s32.totalorder %s207, %s221
    %p223 = scmp.eq.s32.totalorder %s24, 0
    %p224 = por %p222, %p223
    %s226 = sadd.s32 %s225, 1
    %p229 = scmp.eq.s32.totalorder %s18, 1
    %p230 = scmp.ne.s32.totalorder %s225, %s227
    %p231 = scmp.eq.s32.totalorder %s18, 0
    %p232 = por %p230, %p231
    %p233 = scmp.ne.s32.totalorder %s225, %s227
    %p234 = scmp.eq.s32.totalorder %s23, 1
    %p235 = por %p233, %p234
    %p236 = scmp.ne.s32.totalorder %s227, %s228
    %p237 = scmp.eq.s32.totalorder %s23, 0
    %p238 = por %p236, %p237
    %p239 = scmp.ne.s32.totalorder %s227, %s228
    %p240 = scmp.eq.s32.totalorder %s24, 1
    %p241 = por %p239, %p240
    %p243 = scmp.ne.s32.totalorder %s228, %s242
    %p244 = scmp.eq.s32.totalorder %s24, 0
    %p245 = por %p243, %p244
    %s247 = sadd.s32 %s246, 1
    %p250 = scmp.eq.s32.totalorder %s18, 1
    %p251 = scmp.ne.s32.totalorder %s246, %s248
    %p252 = scmp.eq.s32.totalorder %s18, 0
    %p253 = por %p251, %p252
    %p254 = scmp.ne.s32.totalorder %s246, %s248
    %p255 = scmp.eq.s32.totalorder %s23, 1
    %p256 = por %p254, %p255
    %p257 = scmp.ne.s32.totalorder %s248, %s249
    %p258 = scmp.eq.s32.totalorder %s23, 0
    %p259 = por %p257, %p258
    %p260 = scmp.ne.s32.totalorder %s248, %s249
    %p261 = scmp.eq.s32.totalorder %s24, 1
    %p262 = por %p260, %p261
    %p264 = scmp.ne.s32.totalorder %s249, %s263
    %p265 = scmp.eq.s32.totalorder %s24, 0
    %p266 = por %p264, %p265
    %s268 = sadd.s32 %s267, 1
    %p271 = scmp.eq.s32.totalorder %s18, 1
    %p272 = scmp.ne.s32.totalorder %s267, %s269
    %p273 = scmp.eq.s32.totalorder %s18, 0
    %p274 = por %p272, %p273
    %p275 = scmp.ne.s32.totalorder %s267, %s269
    %p276 = scmp.eq.s32.totalorder %s23, 1
    %p277 = por %p275, %p276
    %p278 = scmp.ne.s32.totalorder %s269, %s270
    %p279 = scmp.eq.s32.totalorder %s23, 0
    %p280 = por %p278, %p279
    %p281 = scmp.ne.s32.totalorder %s269, %s270
    %p282 = scmp.eq.s32.totalorder %s24, 1
    %p283 = por %p281, %p282
    %p285 = scmp.ne.s32.totalorder %s270, %s284
    %p286 = scmp.eq.s32.totalorder %s24, 0
    %p287 = por %p285, %p286
    %s288 = ssub.s32 %s18, %s25
    %p289 = scmp.eq.s32.totalorder %s288, 0
    %s291 = sadd.s32 %s290, 1
    %s292 = scalar_select %p289, %s290, %s291
    %p295 = pneg %p289
    %p296 = scmp.eq.s32.totalorder %s18, 1
    %p297 = por %p295, %p296
    %p298 = scmp.ne.s32.totalorder %s290, %s293
    %p299 = scmp.eq.s32.totalorder %s18, 0
    %p300 = por %p298, %p299
    %p301 = scmp.ne.s32.totalorder %s290, %s293
    %p302 = scmp.eq.s32.totalorder %s23, 1
    %p303 = por %p301, %p302
    %p304 = scmp.ne.s32.totalorder %s293, %s294
    %p305 = scmp.eq.s32.totalorder %s23, 0
    %p306 = por %p304, %p305
    %p307 = scmp.ne.s32.totalorder %s293, %s294
    %p308 = scmp.eq.s32.totalorder %s24, 1
    %p309 = por %p307, %p308
    %p311 = scmp.ne.s32.totalorder %s294, %s310
    %p312 = scmp.eq.s32.totalorder %s24, 0
    %p313 = por %p311, %p312
    %p314 = scmp.le.s32.totalorder 1, %s18
    %p315 = scmp.lt.s32.totalorder %s18, 3
    %p316 = pnand %p314, %p315
    %p317 = pneg %p316
    // Predicated region
    $region9: #{polymer_multitask_fnn.1} parent=5 // pred_check
      _
    $region10: #{polymer_multitask_fnn.1} parent=5 // pred_check_branch
      %319 = sbr.rel (%p316) target = $region12
    $region11: #{polymer_multitask_fnn.1} parent=5 // pred_region
      %s320 = ssub.s32 %s18, 1
      // Predicated region
      $region13: #{polymer_multitask_fnn.1} parent=11 // pred_check
        %p321 = pneg %p91
      $region14: #{polymer_multitask_fnn.1} parent=11 // pred_check_branch
        %323 = sbr.rel (%p321) target = $region16
      $region15: #{polymer_multitask_fnn.1} parent=11 // pred_region
        _
      $region16: #{polymer_multitask_fnn.1} parent=11 // pred_fallthru
        _
      // Predicated region
      $region17: #{polymer_multitask_fnn.1} parent=11 // pred_check
        %p324 = pneg %p112
      $region18: #{polymer_multitask_fnn.1} parent=11 // pred_check_branch
        %326 = sbr.rel (%p324) target = $region20
      $region19: #{polymer_multitask_fnn.1} parent=11 // pred_region
        _
      $region20: #{polymer_multitask_fnn.1} parent=11 // pred_fallthru
        _
      // Predicated region
      $region21: #{polymer_multitask_fnn.1} parent=11 // pred_check
        %p327 = pneg %p133
      $region22: #{polymer_multitask_fnn.1} parent=11 // pred_check_branch
        %329 = sbr.rel (%p327) target = $region24
      $region23: #{polymer_multitask_fnn.1} parent=11 // pred_region
        _
      $region24: #{polymer_multitask_fnn.1} parent=11 // pred_fallthru
        _
      // Predicated region
      $region25: #{polymer_multitask_fnn.1} parent=11 // pred_check
        %p330 = pneg %p154
      $region26: #{polymer_multitask_fnn.1} parent=11 // pred_check_branch
        %332 = sbr.rel (%p330) target = $region28
      $region27: #{polymer_multitask_fnn.1} parent=11 // pred_region
        _
      $region28: #{polymer_multitask_fnn.1} parent=11 // pred_fallthru
        _
      // Predicated region
      $region29: #{polymer_multitask_fnn.1} parent=11 // pred_check
        %p333 = pneg %p175
      $region30: #{polymer_multitask_fnn.1} parent=11 // pred_check_branch
        %335 = sbr.rel (%p333) target = $region32
      $region31: #{polymer_multitask_fnn.1} parent=11 // pred_region
        _
      $region32: #{polymer_multitask_fnn.1} parent=11 // pred_fallthru
        _
      // Predicated region
      $region33: #{polymer_multitask_fnn.1} parent=11 // pred_check
        %p336 = pneg %p196
      $region34: #{polymer_multitask_fnn.1} parent=11 // pred_check_branch
        %338 = sbr.rel (%p336) target = $region36
      $region35: #{polymer_multitask_fnn.1} parent=11 // pred_region
        _
      $region36: #{polymer_multitask_fnn.1} parent=11 // pred_fallthru
        _
      // Predicated region
      $region37: #{polymer_multitask_fnn.1} parent=11 // pred_check
        %p339 = pneg %p217
      $region38: #{polymer_multitask_fnn.1} parent=11 // pred_check_branch
        %341 = sbr.rel (%p339) target = $region40
      $region39: #{polymer_multitask_fnn.1} parent=11 // pred_region
        _
      $region40: #{polymer_multitask_fnn.1} parent=11 // pred_fallthru
        _
      // Predicated region
      $region41: #{polymer_multitask_fnn.1} parent=11 // pred_check
        %p342 = pneg %p238
      $region42: #{polymer_multitask_fnn.1} parent=11 // pred_check_branch
        %344 = sbr.rel (%p342) target = $region44
      $region43: #{polymer_multitask_fnn.1} parent=11 // pred_region
        _
      $region44: #{polymer_multitask_fnn.1} parent=11 // pred_fallthru
        _
      // Predicated region
      $region45: #{polymer_multitask_fnn.1} parent=11 // pred_check
        %p345 = pneg %p259
      $region46: #{polymer_multitask_fnn.1} parent=11 // pred_check_branch
        %347 = sbr.rel (%p345) target = $region48
      $region47: #{polymer_multitask_fnn.1} parent=11 // pred_region
        _
      $region48: #{polymer_multitask_fnn.1} parent=11 // pred_fallthru
        _
      // Predicated region
      $region49: #{polymer_multitask_fnn.1} parent=11 // pred_check
        %p348 = pneg %p280
      $region50: #{polymer_multitask_fnn.1} parent=11 // pred_check_branch
        %350 = sbr.rel (%p348) target = $region52
      $region51: #{polymer_multitask_fnn.1} parent=11 // pred_region
        _
      $region52: #{polymer_multitask_fnn.1} parent=11 // pred_fallthru
        _
    $region12: #{polymer_multitask_fnn.1} parent=5 // pred_fallthru
      _
    %p351 = scmp.lt.s32.totalorder %s18, 2
    // Predicated region
    $region53: #{polymer_multitask_fnn.1} parent=5 // pred_check
      %p352 = pneg %p351
    $region54: #{polymer_multitask_fnn.1} parent=5 // pred_check_branch
      %354 = sbr.rel (%p352) target = $region56
    $region55: #{polymer_multitask_fnn.1} parent=5 // pred_region
      // Predicated region
      $region57: #{polymer_multitask_fnn.1} parent=55 // pred_check
        %p355 = pneg %p38
      $region58: #{polymer_multitask_fnn.1} parent=55 // pred_check_branch
        %357 = sbr.rel (%p355) target = $region60
      $region59: #{polymer_multitask_fnn.1} parent=55 // pred_region
        %s358 = smul.u32 16, %s18
        %p359 = scmp.lt.s32.totalorder %s358, 31
        %s360 = scalar_select %p359, %s358, 31
        %s361 = smul.addr %s360, 8
        %s362 = scalar_lea.vmem %s0, %s361
        %s363 = smul.u32 16, %s18
      $region60: #{polymer_multitask_fnn.1} parent=55 // pred_fallthru
        _
      // Predicated region
      $region61: #{polymer_multitask_fnn.1} parent=55 // pred_check
        %p364 = pneg %p64
      $region62: #{polymer_multitask_fnn.1} parent=55 // pred_check_branch
        %366 = sbr.rel (%p364) target = $region64
      $region63: #{polymer_multitask_fnn.1} parent=55 // pred_region
        %s367 = smul.u32 16, %s18
        %p368 = scmp.lt.s32.totalorder %s367, 31
        %s369 = scalar_select %p368, %s367, 31
        %s370 = smul.addr %s369, 8
        %s371 = scalar_lea.vmem %s1, %s370
        %s372 = smul.u32 16, %s18
      $region64: #{polymer_multitask_fnn.1} parent=55 // pred_fallthru
        _
    $region56: #{polymer_multitask_fnn.1} parent=5 // pred_fallthru
      _
    %p373 = scmp.le.s32.totalorder 1, %s18
    %p374 = scmp.lt.s32.totalorder %s18, 3
    %p375 = pnand %p373, %p374
    %p376 = pneg %p375
    // Predicated region
    $region65: #{polymer_multitask_fnn.1} parent=5 // pred_check
      _
    $region66: #{polymer_multitask_fnn.1} parent=5 // pred_check_branch
      %378 = sbr.rel (%p375) target = $region68
    $region67: #{polymer_multitask_fnn.1} parent=5 // pred_region
      %s379 = ssub.s32 %s18, 1
      %s380 = smul.u32 16, %s23
      %p381 = scmp.lt.s32.totalorder %s380, 31
      %s382 = scalar_select %p381, %s380, 31
      %s383 = smul.addr %s382, 8
      %s384 = scalar_lea.vmem %s0, %s383
      %p385 = pneg %p44
      %p386 = pneg %p41
      %s387 = smul.u32 16, %s23
      %p388 = scmp.lt.s32.totalorder %s387, 31
      %s389 = scalar_select %p388, %s387, 31
      %s390 = smul.addr %s389, 8
      %s391 = scalar_lea.vmem %s1, %s390
      %p392 = pneg %p70
      %p393 = pneg %p67
      %p394 = pneg %p91
      %p395 = pneg %p88
      %p396 = pneg %p112
      %p397 = pneg %p109
      %p398 = pneg %p133
      %p399 = pneg %p130
      %p400 = pneg %p154
      %p401 = pneg %p151
      %p402 = pneg %p175
      %p403 = pneg %p172
      %p404 = pneg %p196
      %p405 = pneg %p193
      %p406 = pneg %p217
      %p407 = pneg %p214
      %p408 = pneg %p238
      %p409 = pneg %p235
      %p410 = pneg %p259
      %p411 = pneg %p256
      %p412 = pneg %p280
      %p413 = pneg %p277
      %p414 = pneg %p306
      %p415 = pneg %p303
      %s416 = smul.u32 16, %s23
      %p417 = scmp.lt.s32.totalorder %s416, 31
      %s418 = scalar_select %p417, %s416, 31
      %s419 = smul.addr %s418, 8
      %s420 = scalar_lea.vmem %s12, %s419
      %s421 = smul.u32 16, %s23
      %p422 = scmp.lt.s32.totalorder %s421, 31
      %s423 = scalar_select %p422, %s421, 31
      %s424 = smul.addr %s423, 8
      %s425 = scalar_lea.vmem %s0, %s424
      %s426 = smul.u32 16, %s23
      %s427 = smul.u32 16, %s23
      %p428 = scmp.lt.s32.totalorder %s427, 31
      %s429 = scalar_select %p428, %s427, 31
      %s430 = smul.addr %s429, 8
      %s431 = scalar_lea.vmem %s1, %s430
      %s432 = smul.u32 16, %s23
      %s433 = smul.u32 16, %s23
      %p434 = scmp.lt.s32.totalorder %s433, 31
      %s435 = scalar_select %p434, %s433, 31
      %s436 = smul.addr %s435, 8
      %s437 = scalar_lea.vmem %s12, %s436
      %s438 = smul.u32 16, %s23
      %v439 = vld [vmem:[%s425] sm:$0xff]
      %v440 = vld [vmem:[%s425 + $0x8] sm:$0xff]
      %v441 = vld [vmem:[%s425 + $0x10] sm:$0xff]
      %v442 = vld [vmem:[%s425 + $0x18] sm:$0xff]
      %v443 = vld [vmem:[%s425 + $0x20] sm:$0xff]
      %v444 = vld [vmem:[%s425 + $0x28] sm:$0xff]
      %v445 = vld [vmem:[%s425 + $0x30] sm:$0xff]
      %v446 = vld [vmem:[%s425 + $0x38] sm:$0xff]
      %v447 = vld [vmem:[%s425 + $0x40] sm:$0xff]
      %v448 = vld [vmem:[%s425 + $0x48] sm:$0xff]
      %v449 = vld [vmem:[%s425 + $0x50] sm:$0xff]
      %v450 = vld [vmem:[%s425 + $0x58] sm:$0xff]
      %v451 = vld [vmem:[%s425 + $0x60] sm:$0xff]
      %v452 = vld [vmem:[%s425 + $0x68] sm:$0xff]
      %v453 = vld [vmem:[%s425 + $0x70] sm:$0xff]
      %v454 = vld [vmem:[%s425 + $0x78] sm:$0xff]
      %v455 = vld [vmem:[%s431] sm:$0xff]
      %v456 = vld [vmem:[%s431 + $0x8] sm:$0xff]
      %v457 = vld [vmem:[%s431 + $0x10] sm:$0xff]
      %v458 = vld [vmem:[%s431 + $0x18] sm:$0xff]
      %v459 = vld [vmem:[%s431 + $0x20] sm:$0xff]
      %v460 = vld [vmem:[%s431 + $0x28] sm:$0xff]
      %v461 = vld [vmem:[%s431 + $0x30] sm:$0xff]
      %v462 = vld [vmem:[%s431 + $0x38] sm:$0xff]
      %v463 = vld [vmem:[%s431 + $0x40] sm:$0xff]
      %v464 = vld [vmem:[%s431 + $0x48] sm:$0xff]
      %v465 = vld [vmem:[%s431 + $0x50] sm:$0xff]
      %v466 = vld [vmem:[%s431 + $0x58] sm:$0xff]
      %v467 = vld [vmem:[%s431 + $0x60] sm:$0xff]
      %v468 = vld [vmem:[%s431 + $0x68] sm:$0xff]
      %v469 = vld [vmem:[%s431 + $0x70] sm:$0xff]
      %v470 = vld [vmem:[%s431 + $0x78] sm:$0xff]
      %v471 = vld [vmem:[%s3] sm:$0x3]
      %v472 = vld [vmem:[%s2] sm:$0xff]
      %v473 = vld [vmem:[%s2 + $0x8] sm:$0xff]
      %v474 = vld [vmem:[%s2 + $0x10] sm:$0xff]
      %v475 = vld [vmem:[%s2 + $0x18] sm:$0x3f]
      %477 = vset.pattern.permute.xlu0 0
      %478 = vperm.xlu0 %477, %v455
      %v479 = vpop.permute.xlu0 %478
      %482 = vset.pattern.permute.xlu0 0
      %483 = vperm.xlu0 %482, %v456
      %v484 = vpop.permute.xlu0 %483
      %487 = vset.pattern.permute.xlu0 0
      %488 = vperm.xlu0 %487, %v457
      %v489 = vpop.permute.xlu0 %488
      %492 = vset.pattern.permute.xlu0 0
      %493 = vperm.xlu0 %492, %v458
      %v494 = vpop.permute.xlu0 %493
      %497 = vset.pattern.permute.xlu0 0
      %498 = vperm.xlu0 %497, %v459
      %v499 = vpop.permute.xlu0 %498
      %502 = vset.pattern.permute.xlu0 0
      %503 = vperm.xlu0 %502, %v460
      %v504 = vpop.permute.xlu0 %503
      %507 = vset.pattern.permute.xlu0 0
      %508 = vperm.xlu0 %507, %v461
      %v509 = vpop.permute.xlu0 %508
      %512 = vset.pattern.permute.xlu0 0
      %513 = vperm.xlu0 %512, %v462
      %v514 = vpop.permute.xlu0 %513
      %517 = vset.pattern.permute.xlu0 0
      %518 = vperm.xlu0 %517, %v463
      %v519 = vpop.permute.xlu0 %518
      %522 = vset.pattern.permute.xlu0 0
      %523 = vperm.xlu0 %522, %v464
      %v524 = vpop.permute.xlu0 %523
      %527 = vset.pattern.permute.xlu0 0
      %528 = vperm.xlu0 %527, %v465
      %v529 = vpop.permute.xlu0 %528
      %532 = vset.pattern.permute.xlu0 0
      %533 = vperm.xlu0 %532, %v466
      %v534 = vpop.permute.xlu0 %533
      %537 = vset.pattern.permute.xlu0 0
      %538 = vperm.xlu0 %537, %v467
      %v539 = vpop.permute.xlu0 %538
      %542 = vset.pattern.permute.xlu0 0
      %543 = vperm.xlu0 %542, %v468
      %v544 = vpop.permute.xlu0 %543
      %547 = vset.pattern.permute.xlu0 0
      %548 = vperm.xlu0 %547, %v469
      %v549 = vpop.permute.xlu0 %548
      %552 = vset.pattern.permute.xlu0 0
      %553 = vperm.xlu0 %552, %v470
      %v554 = vpop.permute.xlu0 %553
      %v556 = vlaneseq
      %v557 = vshrl.u32 %v556, 7
      %v558 = vsub.s32 0, %v557
      %v559 = vrot.slane %v471, %v558
      %v560 = vmul.f32 %v479, %v559
      %v561 = vmul.f32 %v484, %v559
      %v562 = vmul.f32 %v489, %v559
      %v563 = vmul.f32 %v494, %v559
      %v564 = vmul.f32 %v499, %v559
      %v565 = vmul.f32 %v504, %v559
      %v566 = vmul.f32 %v509, %v559
      %v567 = vmul.f32 %v514, %v559
      %v568 = vmul.f32 %v519, %v559
      %v569 = vmul.f32 %v524, %v559
      %v570 = vmul.f32 %v529, %v559
      %v571 = vmul.f32 %v534, %v559
      %v572 = vmul.f32 %v539, %v559
      %v573 = vmul.f32 %v544, %v559
      %v574 = vmul.f32 %v549, %v559
      %v575 = vmul.f32 %v554, %v559
      %vm576 = vcmask 244736
      %v578 = vsel %vm576, %v439, 0
      %v581 = vsel %vm576, %v440, 0
      %v584 = vsel %vm576, %v441, 0
      %v587 = vsel %vm576, %v442, 0
      %v590 = vsel %vm576, %v443, 0
      %v593 = vsel %vm576, %v444, 0
      %v596 = vsel %vm576, %v445, 0
      %v599 = vsel %vm576, %v446, 0
      %v602 = vsel %vm576, %v447, 0
      %v605 = vsel %vm576, %v448, 0
      %v608 = vsel %vm576, %v449, 0
      %v611 = vsel %vm576, %v450, 0
      %v614 = vsel %vm576, %v451, 0
      %v617 = vsel %vm576, %v452, 0
      %v620 = vsel %vm576, %v453, 0
      %v623 = vsel %vm576, %v454, 0
      %vm625 = vcmask 1045504
      %v627 = vsel %vm625, %v475, 0
      %629 = vmatprep.subr.mxu0 0.0
      %630 = vmatpush1.msra.mxu0 %v472
      %631 = vmatprep.subr.mxu0 0.0
      %632 = vmatpush1.msra.mxu0 %v473
      %633 = vmatprep.subr.mxu0 0.0
      %634 = vmatpush1.msra.mxu0 %v474
      %635 = vmatprep.subr.mxu0 0.0
      %636 = vmatpush1.msra.mxu0 %v627
      %637 = vmatprep.subr.mxu0 0.0
      %638 = vmatpush1.msra.mxu0 0.0
      %639 = vmatprep.subr.mxu0 0.0
      %640 = vmatpush1.msra.mxu0 0.0
      %641 = vmatprep.subr.mxu0 0.0
      %642 = vmatpush1.msra.mxu0 0.0
      %643 = vmatprep.subr.mxu0 0.0
      %644 = vmatpush1.msra.mxu0 0.0
      %645 = vmatprep.subr.mxu0 0.0
      %646 = vmatpush1.msra.mxu0 0.0
      %647 = vmatprep.subr.mxu0 0.0
      %648 = vmatpush1.msra.mxu0 0.0
      %649 = vmatprep.subr.mxu0 0.0
      %650 = vmatpush1.msra.mxu0 0.0
      %651 = vmatprep.subr.mxu0 0.0
      %652 = vmatpush1.msra.mxu0 0.0
      %653 = vmatprep.subr.mxu0 0.0
      %654 = vmatpush1.msra.mxu0 0.0
      %655 = vmatprep.subr.mxu0 0.0
      %656 = vmatpush1.msra.mxu0 0.0
      %657 = vmatprep.subr.mxu0 0.0
      %658 = vmatpush1.msra.mxu0 0.0
      %659 = vmatprep.subr.mxu0 0.0
      %660 = vmatpush1.msra.mxu0 0.0
      %661 = vmatprep.subr.mxu0 0.0
      %662 = vmatpush1.msra.mxu0 0.0
      %663 = vmatprep.subr.mxu0 0.0
      %664 = vmatpush1.msra.mxu0 0.0
      %665 = vmatprep.subr.mxu0 0.0
      %666 = vmatpush1.msra.mxu0 0.0
      %667 = vmatprep.subr.mxu0 0.0
      %668 = vmatpush1.msra.mxu0 0.0
      %669 = vmatprep.subr.mxu0 0.0
      %670 = vmatpush1.msra.mxu0 0.0
      %671 = vmatprep.subr.mxu0 0.0
      %672 = vmatpush1.msra.mxu0 0.0
      %673 = vmatprep.subr.mxu0 0.0
      %674 = vmatpush1.msra.mxu0 0.0
      %675 = vmatprep.subr.mxu0 0.0
      %676 = vmatpush1.msra.mxu0 0.0
      %677 = vmatprep.subr.mxu0 0.0
      %678 = vmatpush1.msra.mxu0 0.0
      %679 = vmatprep.subr.mxu0 0.0
      %680 = vmatpush1.msra.mxu0 0.0
      %681 = vmatprep.subr.mxu0 0.0
      %682 = vmatpush1.msra.mxu0 0.0
      %683 = vmatprep.subr.mxu0 0.0
      %684 = vmatpush1.msra.mxu0 0.0
      %685 = vmatprep.subr.mxu0 0.0
      %686 = vmatpush1.msra.mxu0 0.0
      %687 = vmatprep.subr.mxu0 0.0
      %688 = vmatpush1.msra.mxu0 0.0
      %689 = vmatprep.subr.mxu0 0.0
      %690 = vmatpush1.msra.mxu0 0.0
      %691 = vmatprep.subr.mxu0 0.0
      %692 = vmatpush1.msra.mxu0 0.0
      %693 = vmatprep.mubr.f32.mxu0 0.0
      %694 = vmatmul.mubr.f32.gmra.mrb[0].mxu0 %v578
      %v695 = vpop.f32.mrb[0].mxu0
      %v696 = vadd.f32 %v560, %v695
      %v697 = vpop.f32.mrb[0].mxu0
      %698 = vmatprep.mubr.f32.mxu0 0.0
      %699 = vmatmul.mubr.f32.gmra.mrb[0].mxu0 %v581
      %v700 = vpop.f32.mrb[0].mxu0
      %v701 = vadd.f32 %v561, %v700
      %v702 = vpop.f32.mrb[0].mxu0
      %703 = vmatprep.mubr.f32.mxu0 0.0
      %704 = vmatmul.mubr.f32.gmra.mrb[0].mxu0 %v584
      %v705 = vpop.f32.mrb[0].mxu0
      %v706 = vadd.f32 %v562, %v705
      %v707 = vpop.f32.mrb[0].mxu0
      %708 = vmatprep.mubr.f32.mxu0 0.0
      %709 = vmatmul.mubr.f32.gmra.mrb[0].mxu0 %v587
      %v710 = vpop.f32.mrb[0].mxu0
      %v711 = vadd.f32 %v563, %v710
      %v712 = vpop.f32.mrb[0].mxu0
      %713 = vmatprep.mubr.f32.mxu0 0.0
      %714 = vmatmul.mubr.f32.gmra.mrb[0].mxu0 %v590
      %v715 = vpop.f32.mrb[0].mxu0
      %v716 = vadd.f32 %v564, %v715
      %v717 = vpop.f32.mrb[0].mxu0
      %718 = vmatprep.mubr.f32.mxu0 0.0
      %719 = vmatmul.mubr.f32.gmra.mrb[0].mxu0 %v593
      %v720 = vpop.f32.mrb[0].mxu0
      %v721 = vadd.f32 %v565, %v720
      %v722 = vpop.f32.mrb[0].mxu0
      %723 = vmatprep.mubr.f32.mxu0 0.0
      %724 = vmatmul.mubr.f32.gmra.mrb[0].mxu0 %v596
      %v725 = vpop.f32.mrb[0].mxu0
      %v726 = vadd.f32 %v566, %v725
      %v727 = vpop.f32.mrb[0].mxu0
      %728 = vmatprep.mubr.f32.mxu0 0.0
      %729 = vmatmul.mubr.f32.gmra.mrb[0].mxu0 %v599
      %v730 = vpop.f32.mrb[0].mxu0
      %v731 = vadd.f32 %v567, %v730
      %v732 = vpop.f32.mrb[0].mxu0
      %733 = vmatprep.mubr.f32.mxu0 0.0
      %734 = vmatmul.mubr.f32.gmra.mrb[0].mxu0 %v602
      %v735 = vpop.f32.mrb[0].mxu0
      %v736 = vadd.f32 %v568, %v735
      %v737 = vpop.f32.mrb[0].mxu0
      %738 = vmatprep.mubr.f32.mxu0 0.0
      %739 = vmatmul.mubr.f32.gmra.mrb[0].mxu0 %v605
      %v740 = vpop.f32.mrb[0].mxu0
      %v741 = vadd.f32 %v569, %v740
      %v742 = vpop.f32.mrb[0].mxu0
      %743 = vmatprep.mubr.f32.mxu0 0.0
      %744 = vmatmul.mubr.f32.gmra.mrb[0].mxu0 %v608
      %v745 = vpop.f32.mrb[0].mxu0
      %v746 = vadd.f32 %v570, %v745
      %v747 = vpop.f32.mrb[0].mxu0
      %748 = vmatprep.mubr.f32.mxu0 0.0
      %749 = vmatmul.mubr.f32.gmra.mrb[0].mxu0 %v611
      %v750 = vpop.f32.mrb[0].mxu0
      %v751 = vadd.f32 %v571, %v750
      %v752 = vpop.f32.mrb[0].mxu0
      %753 = vmatprep.mubr.f32.mxu0 0.0
      %754 = vmatmul.mubr.f32.gmra.mrb[0].mxu0 %v614
      %v755 = vpop.f32.mrb[0].mxu0
      %v756 = vadd.f32 %v572, %v755
      %v757 = vpop.f32.mrb[0].mxu0
      %758 = vmatprep.mubr.f32.mxu0 0.0
      %759 = vmatmul.mubr.f32.gmra.mrb[0].mxu0 %v617
      %v760 = vpop.f32.mrb[0].mxu0
      %v761 = vadd.f32 %v573, %v760
      %v762 = vpop.f32.mrb[0].mxu0
      %763 = vmatprep.mubr.f32.mxu0 0.0
      %764 = vmatmul.mubr.f32.gmra.mrb[0].mxu0 %v620
      %v765 = vpop.f32.mrb[0].mxu0
      %v766 = vadd.f32 %v574, %v765
      %v767 = vpop.f32.mrb[0].mxu0
      %768 = vmatprep.mubr.f32.mxu0 0.0
      %769 = vmatmul.mubr.f32.gmra.mrb[0].mxu0 %v623
      %v770 = vpop.f32.mrb[0].mxu0
      %v771 = vadd.f32 %v575, %v770
      %v772 = vpop.f32.mrb[0].mxu0
      %773 = vdwg.mxu0
      %774 = vset.pattern.permute.xlu0 1
      %775 = vperm.xlu0 %774, %v455
      %v776 = vpop.permute.xlu0 %775
      %778 = vset.pattern.permute.xlu0 1
      %779 = vperm.xlu0 %778, %v456
      %v780 = vpop.permute.xlu0 %779
      %782 = vset.pattern.permute.xlu0 1
      %783 = vperm.xlu0 %782, %v457
      %v784 = vpop.permute.xlu0 %783
      %786 = vset.pattern.permute.xlu0 1
      %787 = vperm.xlu0 %786, %v458
      %v788 = vpop.permute.xlu0 %787
      %790 = vset.pattern.permute.xlu0 1
      %791 = vperm.xlu0 %790, %v459
      %v792 = vpop.permute.xlu0 %791
      %794 = vset.pattern.permute.xlu0 1
      %795 = vperm.xlu0 %794, %v460
      %v796 = vpop.permute.xlu0 %795
      %798 = vset.pattern.permute.xlu0 1
      %799 = vperm.xlu0 %798, %v461
      %v800 = vpop.permute.xlu0 %799
      %802 = vset.pattern.permute.xlu0 1
      %803 = vperm.xlu0 %802, %v462
      %v804 = vpop.permute.xlu0 %803
      %806 = vset.pattern.permute.xlu0 1
      %807 = vperm.xlu0 %806, %v463
      %v808 = vpop.permute.xlu0 %807
      %810 = vset.pattern.permute.xlu0 1
      %811 = vperm.xlu0 %810, %v464
      %v812 = vpop.permute.xlu0 %811
      %814 = vset.pattern.permute.xlu0 1
      %815 = vperm.xlu0 %814, %v465
      %v816 = vpop.permute.xlu0 %815
      %818 = vset.pattern.permute.xlu0 1
      %819 = vperm.xlu0 %818, %v466
      %v820 = vpop.permute.xlu0 %819
      %822 = vset.pattern.permute.xlu0 1
      %823 = vperm.xlu0 %822, %v467
      %v824 = vpop.permute.xlu0 %823
      %826 = vset.pattern.permute.xlu0 1
      %827 = vperm.xlu0 %826, %v468
      %v828 = vpop.permute.xlu0 %827
      %830 = vset.pattern.permute.xlu0 1
      %831 = vperm.xlu0 %830, %v469
      %v832 = vpop.permute.xlu0 %831
      %834 = vset.pattern.permute.xlu0 1
      %835 = vperm.xlu0 %834, %v470
      %v836 = vpop.permute.xlu0 %835
      %v838 = vlaneseq
      %v839 = vshrl.u32 %v838, 7
      %v840 = vsub.s32 1, %v839
      %v841 = vrot.slane %v471, %v840
      %v842 = vmul.f32 %v776, %v841
      %v843 = vmul.f32 %v780, %v841
      %v844 = vmul.f32 %v784, %v841
      %v845 = vmul.f32 %v788, %v841
      %v846 = vmul.f32 %v792, %v841
      %v847 = vmul.f32 %v796, %v841
      %v848 = vmul.f32 %v800, %v841
      %v849 = vmul.f32 %v804, %v841
      %v850 = vmul.f32 %v808, %v841
      %v851 = vmul.f32 %v812, %v841
      %v852 = vmul.f32 %v816, %v841
      %v853 = vmul.f32 %v820, %v841
      %v854 = vmul.f32 %v824, %v841
      %v855 = vmul.f32 %v828, %v841
      %v856 = vmul.f32 %v832, %v841
      %v857 = vmul.f32 %v836, %v841
      %v858 = vadd.f32 %v696, %v842
      %v859 = vadd.f32 %v701, %v843
      %v860 = vadd.f32 %v706, %v844
      %v861 = vadd.f32 %v711, %v845
      %v862 = vadd.f32 %v716, %v846
      %v863 = vadd.f32 %v721, %v847
      %v864 = vadd.f32 %v726, %v848
      %v865 = vadd.f32 %v731, %v849
      %v866 = vadd.f32 %v736, %v850
      %v867 = vadd.f32 %v741, %v851
      %v868 = vadd.f32 %v746, %v852
      %v869 = vadd.f32 %v751, %v853
      %v870 = vadd.f32 %v756, %v854
      %v871 = vadd.f32 %v761, %v855
      %v872 = vadd.f32 %v766, %v856
      %v873 = vadd.f32 %v771, %v857
      %v874 = vld [vmem:[%s4] sm:$0x1]
      %v876 = vlaneseq
      %v877 = vshrl.u32 %v876, 7
      %v878 = vsub.s32 0, %v877
      %v879 = vrot.slane %v874, %v878
      %v881 = vadd.f32 %v858, %v879
      %v882 = vadd.f32 %v859, %v879
      %v883 = vadd.f32 %v860, %v879
      %v884 = vadd.f32 %v861, %v879
      %v885 = vadd.f32 %v862, %v879
      %v886 = vadd.f32 %v863, %v879
      %v887 = vadd.f32 %v864, %v879
      %v888 = vadd.f32 %v865, %v879
      %v889 = vadd.f32 %v866, %v879
      %v890 = vadd.f32 %v867, %v879
      %v891 = vadd.f32 %v868, %v879
      %v892 = vadd.f32 %v869, %v879
      %v893 = vadd.f32 %v870, %v879
      %v894 = vadd.f32 %v871, %v879
      %v895 = vadd.f32 %v872, %v879
      %v896 = vadd.f32 %v873, %v879
      %v897 = vmax.f32 %v881, 0.0
      %v898 = vmax.f32 %v882, 0.0
      %v899 = vmax.f32 %v883, 0.0
      %v900 = vmax.f32 %v884, 0.0
      %v901 = vmax.f32 %v885, 0.0
      %v902 = vmax.f32 %v886, 0.0
      %v903 = vmax.f32 %v887, 0.0
      %v904 = vmax.f32 %v888, 0.0
      %v905 = vmax.f32 %v889, 0.0
      %v906 = vmax.f32 %v890, 0.0
      %v907 = vmax.f32 %v891, 0.0
      %v908 = vmax.f32 %v892, 0.0
      %v909 = vmax.f32 %v893, 0.0
      %v910 = vmax.f32 %v894, 0.0
      %v911 = vmax.f32 %v895, 0.0
      %v912 = vmax.f32 %v896, 0.0
      %v913 = vld [vmem:[%s5] sm:$0xff]
      %v914 = vld [vmem:[%s5 + $0x8] sm:$0xff]
      %v915 = vld [vmem:[%s5 + $0x10] sm:$0xff]
      %v916 = vld [vmem:[%s5 + $0x18] sm:$0xff]
      %v917 = vld [vmem:[%s5 + $0x20] sm:$0xff]
      %v918 = vld [vmem:[%s5 + $0x28] sm:$0xff]
      %v919 = vld [vmem:[%s5 + $0x30] sm:$0xff]
      %v920 = vld [vmem:[%s5 + $0x38] sm:$0xff]
      %v921 = vld [vmem:[%s6] sm:$0x1]
      %v923 = vlaneseq
      %v924 = vshrl.u32 %v923, 7
      %v925 = vsub.s32 0, %v924
      %v926 = vrot.slane %v921, %v925
      %vm928 = vcmask 523264
      %v930 = vsel %vm928, %v897, 0
      %v933 = vsel %vm928, %v898, 0
      %v936 = vsel %vm928, %v899, 0
      %v939 = vsel %vm928, %v900, 0
      %v942 = vsel %vm928, %v901, 0
      %v945 = vsel %vm928, %v902, 0
      %v948 = vsel %vm928, %v903, 0
      %v951 = vsel %vm928, %v904, 0
      %v954 = vsel %vm928, %v905, 0
      %v957 = vsel %vm928, %v906, 0
      %v960 = vsel %vm928, %v907, 0
      %v963 = vsel %vm928, %v908, 0
      %v966 = vsel %vm928, %v909, 0
      %v969 = vsel %vm928, %v910, 0
      %v972 = vsel %vm928, %v911, 0
      %v975 = vsel %vm928, %v912, 0
      %977 = vmatprep.subr.mxu0 0.0
      %978 = vmatpush1.msra.mxu0 %v913
      %979 = vmatprep.subr.mxu0 0.0
      %980 = vmatpush1.msra.mxu0 %v914
      %981 = vmatprep.subr.mxu0 0.0
      %982 = vmatpush1.msra.mxu0 %v915
      %983 = vmatprep.subr.mxu0 0.0
      %984 = vmatpush1.msra.mxu0 %v916
      %985 = vmatprep.subr.mxu0 0.0
      %986 = vmatpush1.msra.mxu0 %v917
      %987 = vmatprep.subr.mxu0 0.0
      %988 = vmatpush1.msra.mxu0 %v918
      %989 = vmatprep.subr.mxu0 0.0
      %990 = vmatpush1.msra.mxu0 %v919
      %991 = vmatprep.subr.mxu0 0.0
      %992 = vmatpush1.msra.mxu0 %v920
      %993 = vmatprep.subr.mxu0 0.0
      %994 = vmatpush1.msra.mxu0 0.0
      %995 = vmatprep.subr.mxu0 0.0
      %996 = vmatpush1.msra.mxu0 0.0
      %997 = vmatprep.subr.mxu0 0.0
      %998 = vmatpush1.msra.mxu0 0.0
      %999 = vmatprep.subr.mxu0 0.0
      %1000 = vmatpush1.msra.mxu0 0.0
      %1001 = vmatprep.subr.mxu0 0.0
      %1002 = vmatpush1.msra.mxu0 0.0
      %1003 = vmatprep.subr.mxu0 0.0
      %1004 = vmatpush1.msra.mxu0 0.0
      %1005 = vmatprep.subr.mxu0 0.0
      %1006 = vmatpush1.msra.mxu0 0.0
      %1007 = vmatprep.subr.mxu0 0.0
      %1008 = vmatpush1.msra.mxu0 0.0
      %1009 = vmatprep.subr.mxu0 0.0
      %1010 = vmatpush1.msra.mxu0 0.0
      %1011 = vmatprep.subr.mxu0 0.0
      %1012 = vmatpush1.msra.mxu0 0.0
      %1013 = vmatprep.subr.mxu0 0.0
      %1014 = vmatpush1.msra.mxu0 0.0
      %1015 = vmatprep.subr.mxu0 0.0
      %1016 = vmatpush1.msra.mxu0 0.0
      %1017 = vmatprep.subr.mxu0 0.0
      %1018 = vmatpush1.msra.mxu0 0.0
      %1019 = vmatprep.subr.mxu0 0.0
      %1020 = vmatpush1.msra.mxu0 0.0
      %1021 = vmatprep.subr.mxu0 0.0
      %1022 = vmatpush1.msra.mxu0 0.0
      %1023 = vmatprep.subr.mxu0 0.0
      %1024 = vmatpush1.msra.mxu0 0.0
      %1025 = vmatprep.subr.mxu0 0.0
      %1026 = vmatpush1.msra.mxu0 0.0
      %1027 = vmatprep.subr.mxu0 0.0
      %1028 = vmatpush1.msra.mxu0 0.0
      %1029 = vmatprep.subr.mxu0 0.0
      %1030 = vmatpush1.msra.mxu0 0.0
      %1031 = vmatprep.subr.mxu0 0.0
      %1032 = vmatpush1.msra.mxu0 0.0
      %1033 = vmatprep.subr.mxu0 0.0
      %1034 = vmatpush1.msra.mxu0 0.0
      %1035 = vmatprep.subr.mxu0 0.0
      %1036 = vmatpush1.msra.mxu0 0.0
      %1037 = vmatprep.subr.mxu0 0.0
      %1038 = vmatpush1.msra.mxu0 0.0
      %1039 = vmatprep.subr.mxu0 0.0
      %1040 = vmatpush1.msra.mxu0 0.0
      %1041 = vmatprep.mubr.f32.mxu0 0.0
      %1042 = vmatmul.mubr.f32.gmra.mrb[0].mxu0 %v930
      %v1043 = vpop.f32.mrb[0].mxu0
      %v1044 = vadd.f32 %v926, %v1043
      %v1045 = vpop.f32.mrb[0].mxu0
      %1046 = vmatprep.mubr.f32.mxu0 0.0
      %1047 = vmatmul.mubr.f32.gmra.mrb[0].mxu0 %v933
      %v1048 = vpop.f32.mrb[0].mxu0
      %v1049 = vadd.f32 %v926, %v1048
      %v1050 = vpop.f32.mrb[0].mxu0
      %1051 = vmatprep.mubr.f32.mxu0 0.0
      %1052 = vmatmul.mubr.f32.gmra.mrb[0].mxu0 %v936
      %v1053 = vpop.f32.mrb[0].mxu0
      %v1054 = vadd.f32 %v926, %v1053
      %v1055 = vpop.f32.mrb[0].mxu0
      %1056 = vmatprep.mubr.f32.mxu0 0.0
      %1057 = vmatmul.mubr.f32.gmra.mrb[0].mxu0 %v939
      %v1058 = vpop.f32.mrb[0].mxu0
      %v1059 = vadd.f32 %v926, %v1058
      %v1060 = vpop.f32.mrb[0].mxu0
      %1061 = vmatprep.mubr.f32.mxu0 0.0
      %1062 = vmatmul.mubr.f32.gmra.mrb[0].mxu0 %v942
      %v1063 = vpop.f32.mrb[0].mxu0
      %v1064 = vadd.f32 %v926, %v1063
      %v1065 = vpop.f32.mrb[0].mxu0
      %1066 = vmatprep.mubr.f32.mxu0 0.0
      %1067 = vmatmul.mubr.f32.gmra.mrb[0].mxu0 %v945
      %v1068 = vpop.f32.mrb[0].mxu0
      %v1069 = vadd.f32 %v926, %v1068
      %v1070 = vpop.f32.mrb[0].mxu0
      %1071 = vmatprep.mubr.f32.mxu0 0.0
      %1072 = vmatmul.mubr.f32.gmra.mrb[0].mxu0 %v948
      %v1073 = vpop.f32.mrb[0].mxu0
      %v1074 = vadd.f32 %v926, %v1073
      %v1075 = vpop.f32.mrb[0].mxu0
      %1076 = vmatprep.mubr.f32.mxu0 0.0
      %1077 = vmatmul.mubr.f32.gmra.mrb[0].mxu0 %v951
      %v1078 = vpop.f32.mrb[0].mxu0
      %v1079 = vadd.f32 %v926, %v1078
      %v1080 = vpop.f32.mrb[0].mxu0
      %1081 = vmatprep.mubr.f32.mxu0 0.0
      %1082 = vmatmul.mubr.f32.gmra.mrb[0].mxu0 %v954
      %v1083 = vpop.f32.mrb[0].mxu0
      %v1084 = vadd.f32 %v926, %v1083
      %v1085 = vpop.f32.mrb[0].mxu0
      %1086 = vmatprep.mubr.f32.mxu0 0.0
      %1087 = vmatmul.mubr.f32.gmra.mrb[0].mxu0 %v957
      %v1088 = vpop.f32.mrb[0].mxu0
      %v1089 = vadd.f32 %v926, %v1088
      %v1090 = vpop.f32.mrb[0].mxu0
      %1091 = vmatprep.mubr.f32.mxu0 0.0
      %1092 = vmatmul.mubr.f32.gmra.mrb[0].mxu0 %v960
      %v1093 = vpop.f32.mrb[0].mxu0
      %v1094 = vadd.f32 %v926, %v1093
      %v1095 = vpop.f32.mrb[0].mxu0
      %1096 = vmatprep.mubr.f32.mxu0 0.0
      %1097 = vmatmul.mubr.f32.gmra.mrb[0].mxu0 %v963
      %v1098 = vpop.f32.mrb[0].mxu0
      %v1099 = vadd.f32 %v926, %v1098
      %v1100 = vpop.f32.mrb[0].mxu0
      %1101 = vmatprep.mubr.f32.mxu0 0.0
      %1102 = vmatmul.mubr.f32.gmra.mrb[0].mxu0 %v966
      %v1103 = vpop.f32.mrb[0].mxu0
      %v1104 = vadd.f32 %v926, %v1103
      %v1105 = vpop.f32.mrb[0].mxu0
      %1106 = vmatprep.mubr.f32.mxu0 0.0
      %1107 = vmatmul.mubr.f32.gmra.mrb[0].mxu0 %v969
      %v1108 = vpop.f32.mrb[0].mxu0
      %v1109 = vadd.f32 %v926, %v1108
      %v1110 = vpop.f32.mrb[0].mxu0
      %1111 = vmatprep.mubr.f32.mxu0 0.0
      %1112 = vmatmul.mubr.f32.gmra.mrb[0].mxu0 %v972
      %v1113 = vpop.f32.mrb[0].mxu0
      %v1114 = vadd.f32 %v926, %v1113
      %v1115 = vpop.f32.mrb[0].mxu0
      %1116 = vmatprep.mubr.f32.mxu0 0.0
      %1117 = vmatmul.mubr.f32.gmra.mrb[0].mxu0 %v975
      %v1118 = vpop.f32.mrb[0].mxu0
      %v1119 = vadd.f32 %v926, %v1118
      %v1120 = vpop.f32.mrb[0].mxu0
      %1121 = vdwg.mxu0
      %v1122 = vmax.f32 %v1044, 0.0
      %v1123 = vmax.f32 %v1049, 0.0
      %v1124 = vmax.f32 %v1054, 0.0
      %v1125 = vmax.f32 %v1059, 0.0
      %v1126 = vmax.f32 %v1064, 0.0
      %v1127 = vmax.f32 %v1069, 0.0
      %v1128 = vmax.f32 %v1074, 0.0
      %v1129 = vmax.f32 %v1079, 0.0
      %v1130 = vmax.f32 %v1084, 0.0
      %v1131 = vmax.f32 %v1089, 0.0
      %v1132 = vmax.f32 %v1094, 0.0
      %v1133 = vmax.f32 %v1099, 0.0
      %v1134 = vmax.f32 %v1104, 0.0
      %v1135 = vmax.f32 %v1109, 0.0
      %v1136 = vmax.f32 %v1114, 0.0
      %v1137 = vmax.f32 %v1119, 0.0
      %v1138 = vld [vmem:[%s8] sm:$0xff]
      %v1139 = vld [vmem:[%s8 + $0x8] sm:$0xff]
      %v1140 = vld [vmem:[%s8 + $0x10] sm:$0xff]
      %v1141 = vld [vmem:[%s8 + $0x18] sm:$0xff]
      %v1142 = vld [vmem:[%s8 + $0x20] sm:$0xff]
      %v1143 = vld [vmem:[%s8 + $0x28] sm:$0xff]
      %v1144 = vld [vmem:[%s8 + $0x30] sm:$0xff]
      %v1145 = vld [vmem:[%s8 + $0x38] sm:$0xff]
      %v1146 = vld [vmem:[%s9] sm:$0x1]
      %v1148 = vlaneseq
      %v1149 = vshrl.u32 %v1148, 7
      %v1150 = vsub.s32 0, %v1149
      %v1151 = vrot.slane %v1146, %v1150
      %v1154 = vsel %vm928, %v1122, 0
      %v1157 = vsel %vm928, %v1123, 0
      %v1160 = vsel %vm928, %v1124, 0
      %v1163 = vsel %vm928, %v1125, 0
      %v1166 = vsel %vm928, %v1126, 0
      %v1169 = vsel %vm928, %v1127, 0
      %v1172 = vsel %vm928, %v1128, 0
      %v1175 = vsel %vm928, %v1129, 0
      %v1178 = vsel %vm928, %v1130, 0
      %v1181 = vsel %vm928, %v1131, 0
      %v1184 = vsel %vm928, %v1132, 0
      %v1187 = vsel %vm928, %v1133, 0
      %v1190 = vsel %vm928, %v1134, 0
      %v1193 = vsel %vm928, %v1135, 0
      %v1196 = vsel %vm928, %v1136, 0
      %v1199 = vsel %vm928, %v1137, 0
      %1201 = vmatprep.subr.mxu0 0.0
      %1202 = vmatpush1.msra.mxu0 %v1138
      %1203 = vmatprep.subr.mxu0 0.0
      %1204 = vmatpush1.msra.mxu0 %v1139
      %1205 = vmatprep.subr.mxu0 0.0
      %1206 = vmatpush1.msra.mxu0 %v1140
      %1207 = vmatprep.subr.mxu0 0.0
      %1208 = vmatpush1.msra.mxu0 %v1141
      %1209 = vmatprep.subr.mxu0 0.0
      %1210 = vmatpush1.msra.mxu0 %v1142
      %1211 = vmatprep.subr.mxu0 0.0
      %1212 = vmatpush1.msra.mxu0 %v1143
      %1213 = vmatprep.subr.mxu0 0.0
      %1214 = vmatpush1.msra.mxu0 %v1144
      %1215 = vmatprep.subr.mxu0 0.0
      %1216 = vmatpush1.msra.mxu0 %v1145
      %1217 = vmatprep.subr.mxu0 0.0
      %1218 = vmatpush1.msra.mxu0 0.0
      %1219 = vmatprep.subr.mxu0 0.0
      %1220 = vmatpush1.msra.mxu0 0.0
      %1221 = vmatprep.subr.mxu0 0.0
      %1222 = vmatpush1.msra.mxu0 0.0
      %1223 = vmatprep.subr.mxu0 0.0
      %1224 = vmatpush1.msra.mxu0 0.0
      %1225 = vmatprep.subr.mxu0 0.0
      %1226 = vmatpush1.msra.mxu0 0.0
      %1227 = vmatprep.subr.mxu0 0.0
      %1228 = vmatpush1.msra.mxu0 0.0
      %1229 = vmatprep.subr.mxu0 0.0
      %1230 = vmatpush1.msra.mxu0 0.0
      %1231 = vmatprep.subr.mxu0 0.0
      %1232 = vmatpush1.msra.mxu0 0.0
      %1233 = vmatprep.subr.mxu0 0.0
      %1234 = vmatpush1.msra.mxu0 0.0
      %1235 = vmatprep.subr.mxu0 0.0
      %1236 = vmatpush1.msra.mxu0 0.0
      %1237 = vmatprep.subr.mxu0 0.0
      %1238 = vmatpush1.msra.mxu0 0.0
      %1239 = vmatprep.subr.mxu0 0.0
      %1240 = vmatpush1.msra.mxu0 0.0
      %1241 = vmatprep.subr.mxu0 0.0
      %1242 = vmatpush1.msra.mxu0 0.0
      %1243 = vmatprep.subr.mxu0 0.0
      %1244 = vmatpush1.msra.mxu0 0.0
      %1245 = vmatprep.subr.mxu0 0.0
      %1246 = vmatpush1.msra.mxu0 0.0
      %1247 = vmatprep.subr.mxu0 0.0
      %1248 = vmatpush1.msra.mxu0 0.0
      %1249 = vmatprep.subr.mxu0 0.0
      %1250 = vmatpush1.msra.mxu0 0.0
      %1251 = vmatprep.subr.mxu0 0.0
      %1252 = vmatpush1.msra.mxu0 0.0
      %1253 = vmatprep.subr.mxu0 0.0
      %1254 = vmatpush1.msra.mxu0 0.0
      %1255 = vmatprep.subr.mxu0 0.0
      %1256 = vmatpush1.msra.mxu0 0.0
      %1257 = vmatprep.subr.mxu0 0.0
      %1258 = vmatpush1.msra.mxu0 0.0
      %1259 = vmatprep.subr.mxu0 0.0
      %1260 = vmatpush1.msra.mxu0 0.0
      %1261 = vmatprep.subr.mxu0 0.0
      %1262 = vmatpush1.msra.mxu0 0.0
      %1263 = vmatprep.subr.mxu0 0.0
      %1264 = vmatpush1.msra.mxu0 0.0
      %1265 = vmatprep.mubr.f32.mxu0 0.0
      %1266 = vmatmul.mubr.f32.gmra.mrb[0].mxu0 %v1154
      %v1267 = vpop.f32.mrb[0].mxu0
      %v1268 = vadd.f32 %v1151, %v1267
      %v1269 = vpop.f32.mrb[0].mxu0
      %1270 = vmatprep.mubr.f32.mxu0 0.0
      %1271 = vmatmul.mubr.f32.gmra.mrb[0].mxu0 %v1157
      %v1272 = vpop.f32.mrb[0].mxu0
      %v1273 = vadd.f32 %v1151, %v1272
      %v1274 = vpop.f32.mrb[0].mxu0
      %1275 = vmatprep.mubr.f32.mxu0 0.0
      %1276 = vmatmul.mubr.f32.gmra.mrb[0].mxu0 %v1160
      %v1277 = vpop.f32.mrb[0].mxu0
      %v1278 = vadd.f32 %v1151, %v1277
      %v1279 = vpop.f32.mrb[0].mxu0
      %1280 = vmatprep.mubr.f32.mxu0 0.0
      %1281 = vmatmul.mubr.f32.gmra.mrb[0].mxu0 %v1163
      %v1282 = vpop.f32.mrb[0].mxu0
      %v1283 = vadd.f32 %v1151, %v1282
      %v1284 = vpop.f32.mrb[0].mxu0
      %1285 = vmatprep.mubr.f32.mxu0 0.0
      %1286 = vmatmul.mubr.f32.gmra.mrb[0].mxu0 %v1166
      %v1287 = vpop.f32.mrb[0].mxu0
      %v1288 = vadd.f32 %v1151, %v1287
      %v1289 = vpop.f32.mrb[0].mxu0
      %1290 = vmatprep.mubr.f32.mxu0 0.0
      %1291 = vmatmul.mubr.f32.gmra.mrb[0].mxu0 %v1169
      %v1292 = vpop.f32.mrb[0].mxu0
      %v1293 = vadd.f32 %v1151, %v1292
      %v1294 = vpop.f32.mrb[0].mxu0
      %1295 = vmatprep.mubr.f32.mxu0 0.0
      %1296 = vmatmul.mubr.f32.gmra.mrb[0].mxu0 %v1172
      %v1297 = vpop.f32.mrb[0].mxu0
      %v1298 = vadd.f32 %v1151, %v1297
      %v1299 = vpop.f32.mrb[0].mxu0
      %1300 = vmatprep.mubr.f32.mxu0 0.0
      %1301 = vmatmul.mubr.f32.gmra.mrb[0].mxu0 %v1175
      %v1302 = vpop.f32.mrb[0].mxu0
      %v1303 = vadd.f32 %v1151, %v1302
      %v1304 = vpop.f32.mrb[0].mxu0
      %1305 = vmatprep.mubr.f32.mxu0 0.0
      %1306 = vmatmul.mubr.f32.gmra.mrb[0].mxu0 %v1178
      %v1307 = vpop.f32.mrb[0].mxu0
      %v1308 = vadd.f32 %v1151, %v1307
      %v1309 = vpop.f32.mrb[0].mxu0
      %1310 = vmatprep.mubr.f32.mxu0 0.0
      %1311 = vmatmul.mubr.f32.gmra.mrb[0].mxu0 %v1181
      %v1312 = vpop.f32.mrb[0].mxu0
      %v1313 = vadd.f32 %v1151, %v1312
      %v1314 = vpop.f32.mrb[0].mxu0
      %1315 = vmatprep.mubr.f32.mxu0 0.0
      %1316 = vmatmul.mubr.f32.gmra.mrb[0].mxu0 %v1184
      %v1317 = vpop.f32.mrb[0].mxu0
      %v1318 = vadd.f32 %v1151, %v1317
      %v1319 = vpop.f32.mrb[0].mxu0
      %1320 = vmatprep.mubr.f32.mxu0 0.0
      %1321 = vmatmul.mubr.f32.gmra.mrb[0].mxu0 %v1187
      %v1322 = vpop.f32.mrb[0].mxu0
      %v1323 = vadd.f32 %v1151, %v1322
      %v1324 = vpop.f32.mrb[0].mxu0
      %1325 = vmatprep.mubr.f32.mxu0 0.0
      %1326 = vmatmul.mubr.f32.gmra.mrb[0].mxu0 %v1190
      %v1327 = vpop.f32.mrb[0].mxu0
      %v1328 = vadd.f32 %v1151, %v1327
      %v1329 = vpop.f32.mrb[0].mxu0
      %1330 = vmatprep.mubr.f32.mxu0 0.0
      %1331 = vmatmul.mubr.f32.gmra.mrb[0].mxu0 %v1193
      %v1332 = vpop.f32.mrb[0].mxu0
      %v1333 = vadd.f32 %v1151, %v1332
      %v1334 = vpop.f32.mrb[0].mxu0
      %1335 = vmatprep.mubr.f32.mxu0 0.0
      %1336 = vmatmul.mubr.f32.gmra.mrb[0].mxu0 %v1196
      %v1337 = vpop.f32.mrb[0].mxu0
      %v1338 = vadd.f32 %v1151, %v1337
      %v1339 = vpop.f32.mrb[0].mxu0
      %1340 = vmatprep.mubr.f32.mxu0 0.0
      %1341 = vmatmul.mubr.f32.gmra.mrb[0].mxu0 %v1199
      %v1342 = vpop.f32.mrb[0].mxu0
      %v1343 = vadd.f32 %v1151, %v1342
      %v1344 = vpop.f32.mrb[0].mxu0
      %1345 = vdwg.mxu0
      %v1346 = vld [vmem:[%s7] sm:$0x1]
      %1348 = vset.pattern.permute.xlu0 0
      %1349 = vperm.xlu0 %1348, %v1268
      %v1350 = vpop.permute.xlu0 %1349
      %1353 = vset.pattern.permute.xlu0 0
      %1354 = vperm.xlu0 %1353, %v1273
      %v1355 = vpop.permute.xlu0 %1354
      %1358 = vset.pattern.permute.xlu0 0
      %1359 = vperm.xlu0 %1358, %v1278
      %v1360 = vpop.permute.xlu0 %1359
      %1363 = vset.pattern.permute.xlu0 0
      %1364 = vperm.xlu0 %1363, %v1283
      %v1365 = vpop.permute.xlu0 %1364
      %1368 = vset.pattern.permute.xlu0 0
      %1369 = vperm.xlu0 %1368, %v1288
      %v1370 = vpop.permute.xlu0 %1369
      %1373 = vset.pattern.permute.xlu0 0
      %1374 = vperm.xlu0 %1373, %v1293
      %v1375 = vpop.permute.xlu0 %1374
      %1378 = vset.pattern.permute.xlu0 0
      %1379 = vperm.xlu0 %1378, %v1298
      %v1380 = vpop.permute.xlu0 %1379
      %1383 = vset.pattern.permute.xlu0 0
      %1384 = vperm.xlu0 %1383, %v1303
      %v1385 = vpop.permute.xlu0 %1384
      %1388 = vset.pattern.permute.xlu0 0
      %1389 = vperm.xlu0 %1388, %v1308
      %v1390 = vpop.permute.xlu0 %1389
      %1393 = vset.pattern.permute.xlu0 0
      %1394 = vperm.xlu0 %1393, %v1313
      %v1395 = vpop.permute.xlu0 %1394
      %1398 = vset.pattern.permute.xlu0 0
      %1399 = vperm.xlu0 %1398, %v1318
      %v1400 = vpop.permute.xlu0 %1399
      %1403 = vset.pattern.permute.xlu0 0
      %1404 = vperm.xlu0 %1403, %v1323
      %v1405 = vpop.permute.xlu0 %1404
      %1408 = vset.pattern.permute.xlu0 0
      %1409 = vperm.xlu0 %1408, %v1328
      %v1410 = vpop.permute.xlu0 %1409
      %1413 = vset.pattern.permute.xlu0 0
      %1414 = vperm.xlu0 %1413, %v1333
      %v1415 = vpop.permute.xlu0 %1414
      %1418 = vset.pattern.permute.xlu0 0
      %1419 = vperm.xlu0 %1418, %v1338
      %v1420 = vpop.permute.xlu0 %1419
      %1423 = vset.pattern.permute.xlu0 0
      %1424 = vperm.xlu0 %1423, %v1343
      %v1425 = vpop.permute.xlu0 %1424
      %v1428 = vlaneseq
      %v1429 = vshrl.u32 %v1428, 7
      %v1430 = vsub.s32 0, %v1429
      %v1431 = vrot.slane %v1346, %v1430
      %v1433 = vmul.f32 %v1350, %v1431
      %v1434 = vmul.f32 %v1355, %v1431
      %v1435 = vmul.f32 %v1360, %v1431
      %v1436 = vmul.f32 %v1365, %v1431
      %v1437 = vmul.f32 %v1370, %v1431
      %v1438 = vmul.f32 %v1375, %v1431
      %v1439 = vmul.f32 %v1380, %v1431
      %v1440 = vmul.f32 %v1385, %v1431
      %v1441 = vmul.f32 %v1390, %v1431
      %v1442 = vmul.f32 %v1395, %v1431
      %v1443 = vmul.f32 %v1400, %v1431
      %v1444 = vmul.f32 %v1405, %v1431
      %v1445 = vmul.f32 %v1410, %v1431
      %v1446 = vmul.f32 %v1415, %v1431
      %v1447 = vmul.f32 %v1420, %v1431
      %v1448 = vmul.f32 %v1425, %v1431
      %1465 = vrot.lane.b32.xlu0 %v1433, 64
      %v1466 = vpop.permute.xlu0 %1465
      %1467 = vrot.lane.b32.xlu0 %v1434, 64
      %v1468 = vpop.permute.xlu0 %1467
      %1469 = vrot.lane.b32.xlu0 %v1435, 64
      %v1470 = vpop.permute.xlu0 %1469
      %1471 = vrot.lane.b32.xlu0 %v1436, 64
      %v1472 = vpop.permute.xlu0 %1471
      %1473 = vrot.lane.b32.xlu0 %v1437, 64
      %v1474 = vpop.permute.xlu0 %1473
      %1475 = vrot.lane.b32.xlu0 %v1438, 64
      %v1476 = vpop.permute.xlu0 %1475
      %1477 = vrot.lane.b32.xlu0 %v1439, 64
      %v1478 = vpop.permute.xlu0 %1477
      %1479 = vrot.lane.b32.xlu0 %v1440, 64
      %v1480 = vpop.permute.xlu0 %1479
      %1481 = vrot.lane.b32.xlu0 %v1441, 64
      %v1482 = vpop.permute.xlu0 %1481
      %1483 = vrot.lane.b32.xlu0 %v1442, 64
      %v1484 = vpop.permute.xlu0 %1483
      %1485 = vrot.lane.b32.xlu0 %v1443, 64
      %v1486 = vpop.permute.xlu0 %1485
      %1487 = vrot.lane.b32.xlu0 %v1444, 64
      %v1488 = vpop.permute.xlu0 %1487
      %1489 = vrot.lane.b32.xlu0 %v1445, 64
      %v1490 = vpop.permute.xlu0 %1489
      %1491 = vrot.lane.b32.xlu0 %v1446, 64
      %v1492 = vpop.permute.xlu0 %1491
      %1493 = vrot.lane.b32.xlu0 %v1447, 64
      %v1494 = vpop.permute.xlu0 %1493
      %1495 = vrot.lane.b32.xlu0 %v1448, 64
      %v1496 = vpop.permute.xlu0 %1495
      %v1513 = vadd.f32 %v881, %v1466
      %v1514 = vadd.f32 %v882, %v1468
      %v1515 = vadd.f32 %v883, %v1470
      %v1516 = vadd.f32 %v884, %v1472
      %v1517 = vadd.f32 %v885, %v1474
      %v1518 = vadd.f32 %v886, %v1476
      %v1519 = vadd.f32 %v887, %v1478
      %v1520 = vadd.f32 %v888, %v1480
      %v1521 = vadd.f32 %v889, %v1482
      %v1522 = vadd.f32 %v890, %v1484
      %v1523 = vadd.f32 %v891, %v1486
      %v1524 = vadd.f32 %v892, %v1488
      %v1525 = vadd.f32 %v893, %v1490
      %v1526 = vadd.f32 %v894, %v1492
      %v1527 = vadd.f32 %v895, %v1494
      %v1528 = vadd.f32 %v896, %v1496
      %v1529 = vmax.f32 %v1513, 0.0
      %v1530 = vmax.f32 %v1514, 0.0
      %v1531 = vmax.f32 %v1515, 0.0
      %v1532 = vmax.f32 %v1516, 0.0
      %v1533 = vmax.f32 %v1517, 0.0
      %v1534 = vmax.f32 %v1518, 0.0
      %v1535 = vmax.f32 %v1519, 0.0
      %v1536 = vmax.f32 %v1520, 0.0
      %v1537 = vmax.f32 %v1521, 0.0
      %v1538 = vmax.f32 %v1522, 0.0
      %v1539 = vmax.f32 %v1523, 0.0
      %v1540 = vmax.f32 %v1524, 0.0
      %v1541 = vmax.f32 %v1525, 0.0
      %v1542 = vmax.f32 %v1526, 0.0
      %v1543 = vmax.f32 %v1527, 0.0
      %v1544 = vmax.f32 %v1528, 0.0
      %1545 = vset.pattern.permute.xlu0 1
      %1546 = vperm.xlu0 %1545, %v1268
      %v1547 = vpop.permute.xlu0 %1546
      %1549 = vset.pattern.permute.xlu0 1
      %1550 = vperm.xlu0 %1549, %v1273
      %v1551 = vpop.permute.xlu0 %1550
      %1553 = vset.pattern.permute.xlu0 1
      %1554 = vperm.xlu0 %1553, %v1278
      %v1555 = vpop.permute.xlu0 %1554
      %1557 = vset.pattern.permute.xlu0 1
      %1558 = vperm.xlu0 %1557, %v1283
      %v1559 = vpop.permute.xlu0 %1558
      %1561 = vset.pattern.permute.xlu0 1
      %1562 = vperm.xlu0 %1561, %v1288
      %v1563 = vpop.permute.xlu0 %1562
      %1565 = vset.pattern.permute.xlu0 1
      %1566 = vperm.xlu0 %1565, %v1293
      %v1567 = vpop.permute.xlu0 %1566
      %1569 = vset.pattern.permute.xlu0 1
      %1570 = vperm.xlu0 %1569, %v1298
      %v1571 = vpop.permute.xlu0 %1570
      %1573 = vset.pattern.permute.xlu0 1
      %1574 = vperm.xlu0 %1573, %v1303
      %v1575 = vpop.permute.xlu0 %1574
      %1577 = vset.pattern.permute.xlu0 1
      %1578 = vperm.xlu0 %1577, %v1308
      %v1579 = vpop.permute.xlu0 %1578
      %1581 = vset.pattern.permute.xlu0 1
      %1582 = vperm.xlu0 %1581, %v1313
      %v1583 = vpop.permute.xlu0 %1582
      %1585 = vset.pattern.permute.xlu0 1
      %1586 = vperm.xlu0 %1585, %v1318
      %v1587 = vpop.permute.xlu0 %1586
      %1589 = vset.pattern.permute.xlu0 1
      %1590 = vperm.xlu0 %1589, %v1323
      %v1591 = vpop.permute.xlu0 %1590
      %1593 = vset.pattern.permute.xlu0 1
      %1594 = vperm.xlu0 %1593, %v1328
      %v1595 = vpop.permute.xlu0 %1594
      %1597 = vset.pattern.permute.xlu0 1
      %1598 = vperm.xlu0 %1597, %v1333
      %v1599 = vpop.permute.xlu0 %1598
      %1601 = vset.pattern.permute.xlu0 1
      %1602 = vperm.xlu0 %1601, %v1338
      %v1603 = vpop.permute.xlu0 %1602
      %1605 = vset.pattern.permute.xlu0 1
      %1606 = vperm.xlu0 %1605, %v1343
      %v1607 = vpop.permute.xlu0 %1606
      %v1609 = vmul.f32 %v1547, %v1431
      %v1610 = vmul.f32 %v1551, %v1431
      %v1611 = vmul.f32 %v1555, %v1431
      %v1612 = vmul.f32 %v1559, %v1431
      %v1613 = vmul.f32 %v1563, %v1431
      %v1614 = vmul.f32 %v1567, %v1431
      %v1615 = vmul.f32 %v1571, %v1431
      %v1616 = vmul.f32 %v1575, %v1431
      %v1617 = vmul.f32 %v1579, %v1431
      %v1618 = vmul.f32 %v1583, %v1431
      %v1619 = vmul.f32 %v1587, %v1431
      %v1620 = vmul.f32 %v1591, %v1431
      %v1621 = vmul.f32 %v1595, %v1431
      %v1622 = vmul.f32 %v1599, %v1431
      %v1623 = vmul.f32 %v1603, %v1431
      %v1624 = vmul.f32 %v1607, %v1431
      %1641 = vrot.lane.b32.xlu0 %v1609, 32
      %v1642 = vpop.permute.xlu0 %1641
      %1643 = vrot.lane.b32.xlu0 %v1610, 32
      %v1644 = vpop.permute.xlu0 %1643
      %1645 = vrot.lane.b32.xlu0 %v1611, 32
      %v1646 = vpop.permute.xlu0 %1645
      %1647 = vrot.lane.b32.xlu0 %v1612, 32
      %v1648 = vpop.permute.xlu0 %1647
      %1649 = vrot.lane.b32.xlu0 %v1613, 32
      %v1650 = vpop.permute.xlu0 %1649
      %1651 = vrot.lane.b32.xlu0 %v1614, 32
      %v1652 = vpop.permute.xlu0 %1651
      %1653 = vrot.lane.b32.xlu0 %v1615, 32
      %v1654 = vpop.permute.xlu0 %1653
      %1655 = vrot.lane.b32.xlu0 %v1616, 32
      %v1656 = vpop.permute.xlu0 %1655
      %1657 = vrot.lane.b32.xlu0 %v1617, 32
      %v1658 = vpop.permute.xlu0 %1657
      %1659 = vrot.lane.b32.xlu0 %v1618, 32
      %v1660 = vpop.permute.xlu0 %1659
      %1661 = vrot.lane.b32.xlu0 %v1619, 32
      %v1662 = vpop.permute.xlu0 %1661
      %1663 = vrot.lane.b32.xlu0 %v1620, 32
      %v1664 = vpop.permute.xlu0 %1663
      %1665 = vrot.lane.b32.xlu0 %v1621, 32
      %v1666 = vpop.permute.xlu0 %1665
      %1667 = vrot.lane.b32.xlu0 %v1622, 32
      %v1668 = vpop.permute.xlu0 %1667
      %1669 = vrot.lane.b32.xlu0 %v1623, 32
      %v1670 = vpop.permute.xlu0 %1669
      %1671 = vrot.lane.b32.xlu0 %v1624, 32
      %v1672 = vpop.permute.xlu0 %1671
      %v1689 = vadd.f32 %v1044, %v1642
      %v1690 = vadd.f32 %v1049, %v1644
      %v1691 = vadd.f32 %v1054, %v1646
      %v1692 = vadd.f32 %v1059, %v1648
      %v1693 = vadd.f32 %v1064, %v1650
      %v1694 = vadd.f32 %v1069, %v1652
      %v1695 = vadd.f32 %v1074, %v1654
      %v1696 = vadd.f32 %v1079, %v1656
      %v1697 = vadd.f32 %v1084, %v1658
      %v1698 = vadd.f32 %v1089, %v1660
      %v1699 = vadd.f32 %v1094, %v1662
      %v1700 = vadd.f32 %v1099, %v1664
      %v1701 = vadd.f32 %v1104, %v1666
      %v1702 = vadd.f32 %v1109, %v1668
      %v1703 = vadd.f32 %v1114, %v1670
      %v1704 = vadd.f32 %v1119, %v1672
      %v1705 = vmax.f32 %v1689, 0.0
      %v1706 = vmax.f32 %v1690, 0.0
      %v1707 = vmax.f32 %v1691, 0.0
      %v1708 = vmax.f32 %v1692, 0.0
      %v1709 = vmax.f32 %v1693, 0.0
      %v1710 = vmax.f32 %v1694, 0.0
      %v1711 = vmax.f32 %v1695, 0.0
      %v1712 = vmax.f32 %v1696, 0.0
      %v1713 = vmax.f32 %v1697, 0.0
      %v1714 = vmax.f32 %v1698, 0.0
      %v1715 = vmax.f32 %v1699, 0.0
      %v1716 = vmax.f32 %v1700, 0.0
      %v1717 = vmax.f32 %v1701, 0.0
      %v1718 = vmax.f32 %v1702, 0.0
      %v1719 = vmax.f32 %v1703, 0.0
      %v1720 = vmax.f32 %v1704, 0.0
      %v1721 = vld [vmem:[%s10] sm:$0xff]
      %v1722 = vld [vmem:[%s10 + $0x8] sm:$0xff]
      %v1723 = vld [vmem:[%s10 + $0x10] sm:$0xff]
      %v1724 = vld [vmem:[%s10 + $0x18] sm:$0xff]
      %v1725 = vld [vmem:[%s10 + $0x20] sm:$0xff]
      %v1726 = vld [vmem:[%s10 + $0x28] sm:$0xff]
      %v1727 = vld [vmem:[%s10 + $0x30] sm:$0xff]
      %v1728 = vld [vmem:[%s10 + $0x38] sm:$0xff]
      %v1729 = vld [vmem:[%s10 + $0x40] sm:$0xff]
      %v1730 = vld [vmem:[%s10 + $0x48] sm:$0xff]
      %v1731 = vld [vmem:[%s10 + $0x50] sm:$0xff]
      %v1732 = vld [vmem:[%s10 + $0x58] sm:$0xff]
      %1749 = vrot.lane.b32.xlu0 %v1529, 64
      %v1750 = vpop.permute.xlu0 %1749
      %1751 = vrot.lane.b32.xlu0 %v1530, 64
      %v1752 = vpop.permute.xlu0 %1751
      %1753 = vrot.lane.b32.xlu0 %v1531, 64
      %v1754 = vpop.permute.xlu0 %1753
      %1755 = vrot.lane.b32.xlu0 %v1532, 64
      %v1756 = vpop.permute.xlu0 %1755
      %1757 = vrot.lane.b32.xlu0 %v1533, 64
      %v1758 = vpop.permute.xlu0 %1757
      %1759 = vrot.lane.b32.xlu0 %v1534, 64
      %v1760 = vpop.permute.xlu0 %1759
      %1761 = vrot.lane.b32.xlu0 %v1535, 64
      %v1762 = vpop.permute.xlu0 %1761
      %1763 = vrot.lane.b32.xlu0 %v1536, 64
      %v1764 = vpop.permute.xlu0 %1763
      %1765 = vrot.lane.b32.xlu0 %v1537, 64
      %v1766 = vpop.permute.xlu0 %1765
      %1767 = vrot.lane.b32.xlu0 %v1538, 64
      %v1768 = vpop.permute.xlu0 %1767
      %1769 = vrot.lane.b32.xlu0 %v1539, 64
      %v1770 = vpop.permute.xlu0 %1769
      %1771 = vrot.lane.b32.xlu0 %v1540, 64
      %v1772 = vpop.permute.xlu0 %1771
      %1773 = vrot.lane.b32.xlu0 %v1541, 64
      %v1774 = vpop.permute.xlu0 %1773
      %1775 = vrot.lane.b32.xlu0 %v1542, 64
      %v1776 = vpop.permute.xlu0 %1775
      %1777 = vrot.lane.b32.xlu0 %v1543, 64
      %v1778 = vpop.permute.xlu0 %1777
      %1779 = vrot.lane.b32.xlu0 %v1544, 64
      %v1780 = vpop.permute.xlu0 %1779
      %vm1781 = vcmask 261120
      %v1782 = vsel %vm1781, %v1750, 0
      %v1784 = vsel %vm1781, %v1752, 0
      %v1786 = vsel %vm1781, %v1754, 0
      %v1788 = vsel %vm1781, %v1756, 0
      %v1790 = vsel %vm1781, %v1758, 0
      %v1792 = vsel %vm1781, %v1760, 0
      %v1794 = vsel %vm1781, %v1762, 0
      %v1796 = vsel %vm1781, %v1764, 0
      %v1798 = vsel %vm1781, %v1766, 0
      %v1800 = vsel %vm1781, %v1768, 0
      %v1802 = vsel %vm1781, %v1770, 0
      %v1804 = vsel %vm1781, %v1772, 0
      %v1806 = vsel %vm1781, %v1774, 0
      %v1808 = vsel %vm1781, %v1776, 0
      %v1810 = vsel %vm1781, %v1778, 0
      %v1812 = vsel %vm1781, %v1780, 0
      %1814 = vmatprep.subr.mxu0 0.0
      %1815 = vmatpush1.msra.mxu0 %v1729
      %1816 = vmatprep.subr.mxu0 0.0
      %1817 = vmatpush1.msra.mxu0 %v1730
      %1818 = vmatprep.subr.mxu0 0.0
      %1819 = vmatpush1.msra.mxu0 %v1731
      %1820 = vmatprep.subr.mxu0 0.0
      %1821 = vmatpush1.msra.mxu0 %v1732
      %1822 = vmatprep.subr.mxu0 0.0
      %1823 = vmatpush1.msra.mxu0 0.0
      %1824 = vmatprep.subr.mxu0 0.0
      %1825 = vmatpush1.msra.mxu0 0.0
      %1826 = vmatprep.subr.mxu0 0.0
      %1827 = vmatpush1.msra.mxu0 0.0
      %1828 = vmatprep.subr.mxu0 0.0
      %1829 = vmatpush1.msra.mxu0 0.0
      %1830 = vmatprep.subr.mxu0 0.0
      %1831 = vmatpush1.msra.mxu0 0.0
      %1832 = vmatprep.subr.mxu0 0.0
      %1833 = vmatpush1.msra.mxu0 0.0
      %1834 = vmatprep.subr.mxu0 0.0
      %1835 = vmatpush1.msra.mxu0 0.0
      %1836 = vmatprep.subr.mxu0 0.0
      %1837 = vmatpush1.msra.mxu0 0.0
      %1838 = vmatprep.subr.mxu0 0.0
      %1839 = vmatpush1.msra.mxu0 0.0
      %1840 = vmatprep.subr.mxu0 0.0
      %1841 = vmatpush1.msra.mxu0 0.0
      %1842 = vmatprep.subr.mxu0 0.0
      %1843 = vmatpush1.msra.mxu0 0.0
      %1844 = vmatprep.subr.mxu0 0.0
      %1845 = vmatpush1.msra.mxu0 0.0
      %1846 = vmatprep.subr.mxu0 0.0
      %1847 = vmatpush1.msra.mxu0 0.0
      %1848 = vmatprep.subr.mxu0 0.0
      %1849 = vmatpush1.msra.mxu0 0.0
      %1850 = vmatprep.subr.mxu0 0.0
      %1851 = vmatpush1.msra.mxu0 0.0
      %1852 = vmatprep.subr.mxu0 0.0
      %1853 = vmatpush1.msra.mxu0 0.0
      %1854 = vmatprep.subr.mxu0 0.0
      %1855 = vmatpush1.msra.mxu0 0.0
      %1856 = vmatprep.subr.mxu0 0.0
      %1857 = vmatpush1.msra.mxu0 0.0
      %1858 = vmatprep.subr.mxu0 0.0
      %1859 = vmatpush1.msra.mxu0 0.0
      %1860 = vmatprep.subr.mxu0 0.0
      %1861 = vmatpush1.msra.mxu0 0.0
      %1862 = vmatprep.subr.mxu0 0.0
      %1863 = vmatpush1.msra.mxu0 0.0
      %1864 = vmatprep.subr.mxu0 0.0
      %1865 = vmatpush1.msra.mxu0 0.0
      %1866 = vmatprep.subr.mxu0 0.0
      %1867 = vmatpush1.msra.mxu0 0.0
      %1868 = vmatprep.subr.mxu0 0.0
      %1869 = vmatpush1.msra.mxu0 0.0
      %1870 = vmatprep.subr.mxu0 0.0
      %1871 = vmatpush1.msra.mxu0 0.0
      %1872 = vmatprep.subr.mxu0 0.0
      %1873 = vmatpush1.msra.mxu0 0.0
      %1874 = vmatprep.subr.mxu0 0.0
      %1875 = vmatpush1.msra.mxu0 0.0
      %1876 = vmatprep.subr.mxu0 0.0
      %1877 = vmatpush1.msra.mxu0 0.0
      %1878 = vmatprep.mubr.f32.mxu0 0.0
      %1879 = vmatmul.mubr.f32.gmra.mrb[0].mxu0 %v1782
      %v1880 = vpop.f32.mrb[0].mxu0
      %v1881 = vadd.f32 0.0, %v1880
      %v1882 = vpop.f32.mrb[0].mxu0
      %1883 = vmatprep.mubr.f32.mxu0 0.0
      %1884 = vmatmul.mubr.f32.gmra.mrb[0].mxu0 %v1784
      %v1885 = vpop.f32.mrb[0].mxu0
      %v1886 = vadd.f32 0.0, %v1885
      %v1887 = vpop.f32.mrb[0].mxu0
      %1888 = vmatprep.mubr.f32.mxu0 0.0
      %1889 = vmatmul.mubr.f32.gmra.mrb[0].mxu0 %v1786
      %v1890 = vpop.f32.mrb[0].mxu0
      %v1891 = vadd.f32 0.0, %v1890
      %v1892 = vpop.f32.mrb[0].mxu0
      %1893 = vmatprep.mubr.f32.mxu0 0.0
      %1894 = vmatmul.mubr.f32.gmra.mrb[0].mxu0 %v1788
      %v1895 = vpop.f32.mrb[0].mxu0
      %v1896 = vadd.f32 0.0, %v1895
      %v1897 = vpop.f32.mrb[0].mxu0
      %1898 = vmatprep.mubr.f32.mxu0 0.0
      %1899 = vmatmul.mubr.f32.gmra.mrb[0].mxu0 %v1790
      %v1900 = vpop.f32.mrb[0].mxu0
      %v1901 = vadd.f32 0.0, %v1900
      %v1902 = vpop.f32.mrb[0].mxu0
      %1903 = vmatprep.mubr.f32.mxu0 0.0
      %1904 = vmatmul.mubr.f32.gmra.mrb[0].mxu0 %v1792
      %v1905 = vpop.f32.mrb[0].mxu0
      %v1906 = vadd.f32 0.0, %v1905
      %v1907 = vpop.f32.mrb[0].mxu0
      %1908 = vmatprep.mubr.f32.mxu0 0.0
      %1909 = vmatmul.mubr.f32.gmra.mrb[0].mxu0 %v1794
      %v1910 = vpop.f32.mrb[0].mxu0
      %v1911 = vadd.f32 0.0, %v1910
      %v1912 = vpop.f32.mrb[0].mxu0
      %1913 = vmatprep.mubr.f32.mxu0 0.0
      %1914 = vmatmul.mubr.f32.gmra.mrb[0].mxu0 %v1796
      %v1915 = vpop.f32.mrb[0].mxu0
      %v1916 = vadd.f32 0.0, %v1915
      %v1917 = vpop.f32.mrb[0].mxu0
      %1918 = vmatprep.mubr.f32.mxu0 0.0
      %1919 = vmatmul.mubr.f32.gmra.mrb[0].mxu0 %v1798
      %v1920 = vpop.f32.mrb[0].mxu0
      %v1921 = vadd.f32 0.0, %v1920
      %v1922 = vpop.f32.mrb[0].mxu0
      %1923 = vmatprep.mubr.f32.mxu0 0.0
      %1924 = vmatmul.mubr.f32.gmra.mrb[0].mxu0 %v1800
      %v1925 = vpop.f32.mrb[0].mxu0
      %v1926 = vadd.f32 0.0, %v1925
      %v1927 = vpop.f32.mrb[0].mxu0
      %1928 = vmatprep.mubr.f32.mxu0 0.0
      %1929 = vmatmul.mubr.f32.gmra.mrb[0].mxu0 %v1802
      %v1930 = vpop.f32.mrb[0].mxu0
      %v1931 = vadd.f32 0.0, %v1930
      %v1932 = vpop.f32.mrb[0].mxu0
      %1933 = vmatprep.mubr.f32.mxu0 0.0
      %1934 = vmatmul.mubr.f32.gmra.mrb[0].mxu0 %v1804
      %v1935 = vpop.f32.mrb[0].mxu0
      %v1936 = vadd.f32 0.0, %v1935
      %v1937 = vpop.f32.mrb[0].mxu0
      %1938 = vmatprep.mubr.f32.mxu0 0.0
      %1939 = vmatmul.mubr.f32.gmra.mrb[0].mxu0 %v1806
      %v1940 = vpop.f32.mrb[0].mxu0
      %v1941 = vadd.f32 0.0, %v1940
      %v1942 = vpop.f32.mrb[0].mxu0
      %1943 = vmatprep.mubr.f32.mxu0 0.0
      %1944 = vmatmul.mubr.f32.gmra.mrb[0].mxu0 %v1808
      %v1945 = vpop.f32.mrb[0].mxu0
      %v1946 = vadd.f32 0.0, %v1945
      %v1947 = vpop.f32.mrb[0].mxu0
      %1948 = vmatprep.mubr.f32.mxu0 0.0
      %1949 = vmatmul.mubr.f32.gmra.mrb[0].mxu0 %v1810
      %v1950 = vpop.f32.mrb[0].mxu0
      %v1951 = vadd.f32 0.0, %v1950
      %v1952 = vpop.f32.mrb[0].mxu0
      %1953 = vmatprep.mubr.f32.mxu0 0.0
      %1954 = vmatmul.mubr.f32.gmra.mrb[0].mxu0 %v1812
      %v1955 = vpop.f32.mrb[0].mxu0
      %v1956 = vadd.f32 0.0, %v1955
      %v1957 = vpop.f32.mrb[0].mxu0
      %1958 = vdwg.mxu0
      %1959 = vmatprep.subr.mxu0 0.0
      %1960 = vmatpush1.msra.mxu0 %v1721
      %1961 = vmatprep.subr.mxu0 0.0
      %1962 = vmatpush1.msra.mxu0 %v1722
      %1963 = vmatprep.subr.mxu0 0.0
      %1964 = vmatpush1.msra.mxu0 %v1723
      %1965 = vmatprep.subr.mxu0 0.0
      %1966 = vmatpush1.msra.mxu0 %v1724
      %1967 = vmatprep.subr.mxu0 0.0
      %1968 = vmatpush1.msra.mxu0 %v1725
      %1969 = vmatprep.subr.mxu0 0.0
      %1970 = vmatpush1.msra.mxu0 %v1726
      %1971 = vmatprep.subr.mxu0 0.0
      %1972 = vmatpush1.msra.mxu0 %v1727
      %1973 = vmatprep.subr.mxu0 0.0
      %1974 = vmatpush1.msra.mxu0 %v1728
      %1975 = vmatprep.subr.mxu0 0.0
      %1976 = vmatpush1.msra.mxu0 0.0
      %1977 = vmatprep.subr.mxu0 0.0
      %1978 = vmatpush1.msra.mxu0 0.0
      %1979 = vmatprep.subr.mxu0 0.0
      %1980 = vmatpush1.msra.mxu0 0.0
      %1981 = vmatprep.subr.mxu0 0.0
      %1982 = vmatpush1.msra.mxu0 0.0
      %1983 = vmatprep.subr.mxu0 0.0
      %1984 = vmatpush1.msra.mxu0 0.0
      %1985 = vmatprep.subr.mxu0 0.0
      %1986 = vmatpush1.msra.mxu0 0.0
      %1987 = vmatprep.subr.mxu0 0.0
      %1988 = vmatpush1.msra.mxu0 0.0
      %1989 = vmatprep.subr.mxu0 0.0
      %1990 = vmatpush1.msra.mxu0 0.0
      %1991 = vmatprep.subr.mxu0 0.0
      %1992 = vmatpush1.msra.mxu0 0.0
      %1993 = vmatprep.subr.mxu0 0.0
      %1994 = vmatpush1.msra.mxu0 0.0
      %1995 = vmatprep.subr.mxu0 0.0
      %1996 = vmatpush1.msra.mxu0 0.0
      %1997 = vmatprep.subr.mxu0 0.0
      %1998 = vmatpush1.msra.mxu0 0.0
      %1999 = vmatprep.subr.mxu0 0.0
      %2000 = vmatpush1.msra.mxu0 0.0
      %2001 = vmatprep.subr.mxu0 0.0
      %2002 = vmatpush1.msra.mxu0 0.0
      %2003 = vmatprep.subr.mxu0 0.0
      %2004 = vmatpush1.msra.mxu0 0.0
      %2005 = vmatprep.subr.mxu0 0.0
      %2006 = vmatpush1.msra.mxu0 0.0
      %2007 = vmatprep.subr.mxu0 0.0
      %2008 = vmatpush1.msra.mxu0 0.0
      %2009 = vmatprep.subr.mxu0 0.0
      %2010 = vmatpush1.msra.mxu0 0.0
      %2011 = vmatprep.subr.mxu0 0.0
      %2012 = vmatpush1.msra.mxu0 0.0
      %2013 = vmatprep.subr.mxu0 0.0
      %2014 = vmatpush1.msra.mxu0 0.0
      %2015 = vmatprep.subr.mxu0 0.0
      %2016 = vmatpush1.msra.mxu0 0.0
      %2017 = vmatprep.subr.mxu0 0.0
      %2018 = vmatpush1.msra.mxu0 0.0
      %2019 = vmatprep.subr.mxu0 0.0
      %2020 = vmatpush1.msra.mxu0 0.0
      %2021 = vmatprep.subr.mxu0 0.0
      %2022 = vmatpush1.msra.mxu0 0.0
      %2023 = vmatprep.mubr.f32.mxu0 0.0
      %2024 = vmatmul.mubr.f32.gmra.mrb[0].mxu0 %v1154
      %v2025 = vpop.f32.mrb[0].mxu0
      %v2026 = vadd.f32 %v1881, %v2025
      %v2027 = vpop.f32.mrb[0].mxu0
      %2028 = vmatprep.mubr.f32.mxu0 0.0
      %2029 = vmatmul.mubr.f32.gmra.mrb[0].mxu0 %v1157
      %v2030 = vpop.f32.mrb[0].mxu0
      %v2031 = vadd.f32 %v1886, %v2030
      %v2032 = vpop.f32.mrb[0].mxu0
      %2033 = vmatprep.mubr.f32.mxu0 0.0
      %2034 = vmatmul.mubr.f32.gmra.mrb[0].mxu0 %v1160
      %v2035 = vpop.f32.mrb[0].mxu0
      %v2036 = vadd.f32 %v1891, %v2035
      %v2037 = vpop.f32.mrb[0].mxu0
      %2038 = vmatprep.mubr.f32.mxu0 0.0
      %2039 = vmatmul.mubr.f32.gmra.mrb[0].mxu0 %v1163
      %v2040 = vpop.f32.mrb[0].mxu0
      %v2041 = vadd.f32 %v1896, %v2040
      %v2042 = vpop.f32.mrb[0].mxu0
      %2043 = vmatprep.mubr.f32.mxu0 0.0
      %2044 = vmatmul.mubr.f32.gmra.mrb[0].mxu0 %v1166
      %v2045 = vpop.f32.mrb[0].mxu0
      %v2046 = vadd.f32 %v1901, %v2045
      %v2047 = vpop.f32.mrb[0].mxu0
      %2048 = vmatprep.mubr.f32.mxu0 0.0
      %2049 = vmatmul.mubr.f32.gmra.mrb[0].mxu0 %v1169
      %v2050 = vpop.f32.mrb[0].mxu0
      %v2051 = vadd.f32 %v1906, %v2050
      %v2052 = vpop.f32.mrb[0].mxu0
      %2053 = vmatprep.mubr.f32.mxu0 0.0
      %2054 = vmatmul.mubr.f32.gmra.mrb[0].mxu0 %v1172
      %v2055 = vpop.f32.mrb[0].mxu0
      %v2056 = vadd.f32 %v1911, %v2055
      %v2057 = vpop.f32.mrb[0].mxu0
      %2058 = vmatprep.mubr.f32.mxu0 0.0
      %2059 = vmatmul.mubr.f32.gmra.mrb[0].mxu0 %v1175
      %v2060 = vpop.f32.mrb[0].mxu0
      %v2061 = vadd.f32 %v1916, %v2060
      %v2062 = vpop.f32.mrb[0].mxu0
      %2063 = vmatprep.mubr.f32.mxu0 0.0
      %2064 = vmatmul.mubr.f32.gmra.mrb[0].mxu0 %v1178
      %v2065 = vpop.f32.mrb[0].mxu0
      %v2066 = vadd.f32 %v1921, %v2065
      %v2067 = vpop.f32.mrb[0].mxu0
      %2068 = vmatprep.mubr.f32.mxu0 0.0
      %2069 = vmatmul.mubr.f32.gmra.mrb[0].mxu0 %v1181
      %v2070 = vpop.f32.mrb[0].mxu0
      %v2071 = vadd.f32 %v1926, %v2070
      %v2072 = vpop.f32.mrb[0].mxu0
      %2073 = vmatprep.mubr.f32.mxu0 0.0
      %2074 = vmatmul.mubr.f32.gmra.mrb[0].mxu0 %v1184
      %v2075 = vpop.f32.mrb[0].mxu0
      %v2076 = vadd.f32 %v1931, %v2075
      %v2077 = vpop.f32.mrb[0].mxu0
      %2078 = vmatprep.mubr.f32.mxu0 0.0
      %2079 = vmatmul.mubr.f32.gmra.mrb[0].mxu0 %v1187
      %v2080 = vpop.f32.mrb[0].mxu0
      %v2081 = vadd.f32 %v1936, %v2080
      %v2082 = vpop.f32.mrb[0].mxu0
      %2083 = vmatprep.mubr.f32.mxu0 0.0
      %2084 = vmatmul.mubr.f32.gmra.mrb[0].mxu0 %v1190
      %v2085 = vpop.f32.mrb[0].mxu0
      %v2086 = vadd.f32 %v1941, %v2085
      %v2087 = vpop.f32.mrb[0].mxu0
      %2088 = vmatprep.mubr.f32.mxu0 0.0
      %2089 = vmatmul.mubr.f32.gmra.mrb[0].mxu0 %v1193
      %v2090 = vpop.f32.mrb[0].mxu0
      %v2091 = vadd.f32 %v1946, %v2090
      %v2092 = vpop.f32.mrb[0].mxu0
      %2093 = vmatprep.mubr.f32.mxu0 0.0
      %2094 = vmatmul.mubr.f32.gmra.mrb[0].mxu0 %v1196
      %v2095 = vpop.f32.mrb[0].mxu0
      %v2096 = vadd.f32 %v1951, %v2095
      %v2097 = vpop.f32.mrb[0].mxu0
      %2098 = vmatprep.mubr.f32.mxu0 0.0
      %2099 = vmatmul.mubr.f32.gmra.mrb[0].mxu0 %v1199
      %v2100 = vpop.f32.mrb[0].mxu0
      %v2101 = vadd.f32 %v1956, %v2100
      %v2102 = vpop.f32.mrb[0].mxu0
      %2103 = vdwg.mxu0
      %v2104 = vld [vmem:[%s10 + $0x60] sm:$0xff]
      %v2105 = vld [vmem:[%s10 + $0x68] sm:$0xff]
      %v2106 = vld [vmem:[%s10 + $0x70] sm:$0xff]
      %v2107 = vld [vmem:[%s10 + $0x78] sm:$0xff]
      %2124 = vrot.lane.b32.xlu0 %v1705, 64
      %v2125 = vpop.permute.xlu0 %2124
      %2126 = vrot.lane.b32.xlu0 %v1706, 64
      %v2127 = vpop.permute.xlu0 %2126
      %2128 = vrot.lane.b32.xlu0 %v1707, 64
      %v2129 = vpop.permute.xlu0 %2128
      %2130 = vrot.lane.b32.xlu0 %v1708, 64
      %v2131 = vpop.permute.xlu0 %2130
      %2132 = vrot.lane.b32.xlu0 %v1709, 64
      %v2133 = vpop.permute.xlu0 %2132
      %2134 = vrot.lane.b32.xlu0 %v1710, 64
      %v2135 = vpop.permute.xlu0 %2134
      %2136 = vrot.lane.b32.xlu0 %v1711, 64
      %v2137 = vpop.permute.xlu0 %2136
      %2138 = vrot.lane.b32.xlu0 %v1712, 64
      %v2139 = vpop.permute.xlu0 %2138
      %2140 = vrot.lane.b32.xlu0 %v1713, 64
      %v2141 = vpop.permute.xlu0 %2140
      %2142 = vrot.lane.b32.xlu0 %v1714, 64
      %v2143 = vpop.permute.xlu0 %2142
      %2144 = vrot.lane.b32.xlu0 %v1715, 64
      %v2145 = vpop.permute.xlu0 %2144
      %2146 = vrot.lane.b32.xlu0 %v1716, 64
      %v2147 = vpop.permute.xlu0 %2146
      %2148 = vrot.lane.b32.xlu0 %v1717, 64
      %v2149 = vpop.permute.xlu0 %2148
      %2150 = vrot.lane.b32.xlu0 %v1718, 64
      %v2151 = vpop.permute.xlu0 %2150
      %2152 = vrot.lane.b32.xlu0 %v1719, 64
      %v2153 = vpop.permute.xlu0 %2152
      %2154 = vrot.lane.b32.xlu0 %v1720, 64
      %v2155 = vpop.permute.xlu0 %2154
      %v2156 = vsel %vm1781, %v2125, 0
      %v2158 = vsel %vm1781, %v2127, 0
      %v2160 = vsel %vm1781, %v2129, 0
      %v2162 = vsel %vm1781, %v2131, 0
      %v2164 = vsel %vm1781, %v2133, 0
      %v2166 = vsel %vm1781, %v2135, 0
      %v2168 = vsel %vm1781, %v2137, 0
      %v2170 = vsel %vm1781, %v2139, 0
      %v2172 = vsel %vm1781, %v2141, 0
      %v2174 = vsel %vm1781, %v2143, 0
      %v2176 = vsel %vm1781, %v2145, 0
      %v2178 = vsel %vm1781, %v2147, 0
      %v2180 = vsel %vm1781, %v2149, 0
      %v2182 = vsel %vm1781, %v2151, 0
      %v2184 = vsel %vm1781, %v2153, 0
      %v2186 = vsel %vm1781, %v2155, 0
      %2188 = vmatprep.subr.mxu0 0.0
      %2189 = vmatpush1.msra.mxu0 %v2104
      %2190 = vmatprep.subr.mxu0 0.0
      %2191 = vmatpush1.msra.mxu0 %v2105
      %2192 = vmatprep.subr.mxu0 0.0
      %2193 = vmatpush1.msra.mxu0 %v2106
      %2194 = vmatprep.subr.mxu0 0.0
      %2195 = vmatpush1.msra.mxu0 %v2107
      %2196 = vmatprep.subr.mxu0 0.0
      %2197 = vmatpush1.msra.mxu0 0.0
      %2198 = vmatprep.subr.mxu0 0.0
      %2199 = vmatpush1.msra.mxu0 0.0
      %2200 = vmatprep.subr.mxu0 0.0
      %2201 = vmatpush1.msra.mxu0 0.0
      %2202 = vmatprep.subr.mxu0 0.0
      %2203 = vmatpush1.msra.mxu0 0.0
      %2204 = vmatprep.subr.mxu0 0.0
      %2205 = vmatpush1.msra.mxu0 0.0
      %2206 = vmatprep.subr.mxu0 0.0
      %2207 = vmatpush1.msra.mxu0 0.0
      %2208 = vmatprep.subr.mxu0 0.0
      %2209 = vmatpush1.msra.mxu0 0.0
      %2210 = vmatprep.subr.mxu0 0.0
      %2211 = vmatpush1.msra.mxu0 0.0
      %2212 = vmatprep.subr.mxu0 0.0
      %2213 = vmatpush1.msra.mxu0 0.0
      %2214 = vmatprep.subr.mxu0 0.0
      %2215 = vmatpush1.msra.mxu0 0.0
      %2216 = vmatprep.subr.mxu0 0.0
      %2217 = vmatpush1.msra.mxu0 0.0
      %2218 = vmatprep.subr.mxu0 0.0
      %2219 = vmatpush1.msra.mxu0 0.0
      %2220 = vmatprep.subr.mxu0 0.0
      %2221 = vmatpush1.msra.mxu0 0.0
      %2222 = vmatprep.subr.mxu0 0.0
      %2223 = vmatpush1.msra.mxu0 0.0
      %2224 = vmatprep.subr.mxu0 0.0
      %2225 = vmatpush1.msra.mxu0 0.0
      %2226 = vmatprep.subr.mxu0 0.0
      %2227 = vmatpush1.msra.mxu0 0.0
      %2228 = vmatprep.subr.mxu0 0.0
      %2229 = vmatpush1.msra.mxu0 0.0
      %2230 = vmatprep.subr.mxu0 0.0
      %2231 = vmatpush1.msra.mxu0 0.0
      %2232 = vmatprep.subr.mxu0 0.0
      %2233 = vmatpush1.msra.mxu0 0.0
      %2234 = vmatprep.subr.mxu0 0.0
      %2235 = vmatpush1.msra.mxu0 0.0
      %2236 = vmatprep.subr.mxu0 0.0
      %2237 = vmatpush1.msra.mxu0 0.0
      %2238 = vmatprep.subr.mxu0 0.0
      %2239 = vmatpush1.msra.mxu0 0.0
      %2240 = vmatprep.subr.mxu0 0.0
      %2241 = vmatpush1.msra.mxu0 0.0
      %2242 = vmatprep.subr.mxu0 0.0
      %2243 = vmatpush1.msra.mxu0 0.0
      %2244 = vmatprep.subr.mxu0 0.0
      %2245 = vmatpush1.msra.mxu0 0.0
      %2246 = vmatprep.subr.mxu0 0.0
      %2247 = vmatpush1.msra.mxu0 0.0
      %2248 = vmatprep.subr.mxu0 0.0
      %2249 = vmatpush1.msra.mxu0 0.0
      %2250 = vmatprep.subr.mxu0 0.0
      %2251 = vmatpush1.msra.mxu0 0.0
      %2252 = vmatprep.mubr.f32.mxu0 0.0
      %2253 = vmatmul.mubr.f32.gmra.mrb[0].mxu0 %v2156
      %v2254 = vpop.f32.mrb[0].mxu0
      %v2255 = vadd.f32 0.0, %v2254
      %v2256 = vpop.f32.mrb[0].mxu0
      %2257 = vmatprep.mubr.f32.mxu0 0.0
      %2258 = vmatmul.mubr.f32.gmra.mrb[0].mxu0 %v2158
      %v2259 = vpop.f32.mrb[0].mxu0
      %v2260 = vadd.f32 0.0, %v2259
      %v2261 = vpop.f32.mrb[0].mxu0
      %2262 = vmatprep.mubr.f32.mxu0 0.0
      %2263 = vmatmul.mubr.f32.gmra.mrb[0].mxu0 %v2160
      %v2264 = vpop.f32.mrb[0].mxu0
      %v2265 = vadd.f32 0.0, %v2264
      %v2266 = vpop.f32.mrb[0].mxu0
      %2267 = vmatprep.mubr.f32.mxu0 0.0
      %2268 = vmatmul.mubr.f32.gmra.mrb[0].mxu0 %v2162
      %v2269 = vpop.f32.mrb[0].mxu0
      %v2270 = vadd.f32 0.0, %v2269
      %v2271 = vpop.f32.mrb[0].mxu0
      %2272 = vmatprep.mubr.f32.mxu0 0.0
      %2273 = vmatmul.mubr.f32.gmra.mrb[0].mxu0 %v2164
      %v2274 = vpop.f32.mrb[0].mxu0
      %v2275 = vadd.f32 0.0, %v2274
      %v2276 = vpop.f32.mrb[0].mxu0
      %2277 = vmatprep.mubr.f32.mxu0 0.0
      %2278 = vmatmul.mubr.f32.gmra.mrb[0].mxu0 %v2166
      %v2279 = vpop.f32.mrb[0].mxu0
      %v2280 = vadd.f32 0.0, %v2279
      %v2281 = vpop.f32.mrb[0].mxu0
      %2282 = vmatprep.mubr.f32.mxu0 0.0
      %2283 = vmatmul.mubr.f32.gmra.mrb[0].mxu0 %v2168
      %v2284 = vpop.f32.mrb[0].mxu0
      %v2285 = vadd.f32 0.0, %v2284
      %v2286 = vpop.f32.mrb[0].mxu0
      %2287 = vmatprep.mubr.f32.mxu0 0.0
      %2288 = vmatmul.mubr.f32.gmra.mrb[0].mxu0 %v2170
      %v2289 = vpop.f32.mrb[0].mxu0
      %v2290 = vadd.f32 0.0, %v2289
      %v2291 = vpop.f32.mrb[0].mxu0
      %2292 = vmatprep.mubr.f32.mxu0 0.0
      %2293 = vmatmul.mubr.f32.gmra.mrb[0].mxu0 %v2172
      %v2294 = vpop.f32.mrb[0].mxu0
      %v2295 = vadd.f32 0.0, %v2294
      %v2296 = vpop.f32.mrb[0].mxu0
      %2297 = vmatprep.mubr.f32.mxu0 0.0
      %2298 = vmatmul.mubr.f32.gmra.mrb[0].mxu0 %v2174
      %v2299 = vpop.f32.mrb[0].mxu0
      %v2300 = vadd.f32 0.0, %v2299
      %v2301 = vpop.f32.mrb[0].mxu0
      %2302 = vmatprep.mubr.f32.mxu0 0.0
      %2303 = vmatmul.mubr.f32.gmra.mrb[0].mxu0 %v2176
      %v2304 = vpop.f32.mrb[0].mxu0
      %v2305 = vadd.f32 0.0, %v2304
      %v2306 = vpop.f32.mrb[0].mxu0
      %2307 = vmatprep.mubr.f32.mxu0 0.0
      %2308 = vmatmul.mubr.f32.gmra.mrb[0].mxu0 %v2178
      %v2309 = vpop.f32.mrb[0].mxu0
      %v2310 = vadd.f32 0.0, %v2309
      %v2311 = vpop.f32.mrb[0].mxu0
      %2312 = vmatprep.mubr.f32.mxu0 0.0
      %2313 = vmatmul.mubr.f32.gmra.mrb[0].mxu0 %v2180
      %v2314 = vpop.f32.mrb[0].mxu0
      %v2315 = vadd.f32 0.0, %v2314
      %v2316 = vpop.f32.mrb[0].mxu0
      %2317 = vmatprep.mubr.f32.mxu0 0.0
      %2318 = vmatmul.mubr.f32.gmra.mrb[0].mxu0 %v2182
      %v2319 = vpop.f32.mrb[0].mxu0
      %v2320 = vadd.f32 0.0, %v2319
      %v2321 = vpop.f32.mrb[0].mxu0
      %2322 = vmatprep.mubr.f32.mxu0 0.0
      %2323 = vmatmul.mubr.f32.gmra.mrb[0].mxu0 %v2184
      %v2324 = vpop.f32.mrb[0].mxu0
      %v2325 = vadd.f32 0.0, %v2324
      %v2326 = vpop.f32.mrb[0].mxu0
      %2327 = vmatprep.mubr.f32.mxu0 0.0
      %2328 = vmatmul.mubr.f32.gmra.mrb[0].mxu0 %v2186
      %v2329 = vpop.f32.mrb[0].mxu0
      %v2330 = vadd.f32 0.0, %v2329
      %v2331 = vpop.f32.mrb[0].mxu0
      %2332 = vdwg.mxu0
      %v2333 = vadd.f32 %v2026, %v2255
      %v2334 = vadd.f32 %v2031, %v2260
      %v2335 = vadd.f32 %v2036, %v2265
      %v2336 = vadd.f32 %v2041, %v2270
      %v2337 = vadd.f32 %v2046, %v2275
      %v2338 = vadd.f32 %v2051, %v2280
      %v2339 = vadd.f32 %v2056, %v2285
      %v2340 = vadd.f32 %v2061, %v2290
      %v2341 = vadd.f32 %v2066, %v2295
      %v2342 = vadd.f32 %v2071, %v2300
      %v2343 = vadd.f32 %v2076, %v2305
      %v2344 = vadd.f32 %v2081, %v2310
      %v2345 = vadd.f32 %v2086, %v2315
      %v2346 = vadd.f32 %v2091, %v2320
      %v2347 = vadd.f32 %v2096, %v2325
      %v2348 = vadd.f32 %v2101, %v2330
      %v2349 = vld [vmem:[%s11] sm:$0x1]
      %v2351 = vlaneseq
      %v2352 = vshrl.u32 %v2351, 7
      %v2353 = vsub.s32 0, %v2352
      %v2354 = vrot.slane %v2349, %v2353
      %v2356 = vadd.f32 %v2333, %v2354
      %v2357 = vadd.f32 %v2334, %v2354
      %v2358 = vadd.f32 %v2335, %v2354
      %v2359 = vadd.f32 %v2336, %v2354
      %v2360 = vadd.f32 %v2337, %v2354
      %v2361 = vadd.f32 %v2338, %v2354
      %v2362 = vadd.f32 %v2339, %v2354
      %v2363 = vadd.f32 %v2340, %v2354
      %v2364 = vadd.f32 %v2341, %v2354
      %v2365 = vadd.f32 %v2342, %v2354
      %v2366 = vadd.f32 %v2343, %v2354
      %v2367 = vadd.f32 %v2344, %v2354
      %v2368 = vadd.f32 %v2345, %v2354
      %v2369 = vadd.f32 %v2346, %v2354
      %v2370 = vadd.f32 %v2347, %v2354
      %v2371 = vadd.f32 %v2348, %v2354
      %vm2372 = vcmask 48128
      %2373 = vst.msk [vmem:[%s437] sm:$0xff] %vm2372, %v2356
      %2374 = vst.msk [vmem:[%s437 + $0x8] sm:$0xff] %vm2372, %v2357
      %2375 = vst.msk [vmem:[%s437 + $0x10] sm:$0xff] %vm2372, %v2358
      %2376 = vst.msk [vmem:[%s437 + $0x18] sm:$0xff] %vm2372, %v2359
      %2377 = vst.msk [vmem:[%s437 + $0x20] sm:$0xff] %vm2372, %v2360
      %2378 = vst.msk [vmem:[%s437 + $0x28] sm:$0xff] %vm2372, %v2361
      %2379 = vst.msk [vmem:[%s437 + $0x30] sm:$0xff] %vm2372, %v2362
      %2380 = vst.msk [vmem:[%s437 + $0x38] sm:$0xff] %vm2372, %v2363
      %2381 = vst.msk [vmem:[%s437 + $0x40] sm:$0xff] %vm2372, %v2364
      %2382 = vst.msk [vmem:[%s437 + $0x48] sm:$0xff] %vm2372, %v2365
      %2383 = vst.msk [vmem:[%s437 + $0x50] sm:$0xff] %vm2372, %v2366
      %2384 = vst.msk [vmem:[%s437 + $0x58] sm:$0xff] %vm2372, %v2367
      %2385 = vst.msk [vmem:[%s437 + $0x60] sm:$0xff] %vm2372, %v2368
      %2386 = vst.msk [vmem:[%s437 + $0x68] sm:$0xff] %vm2372, %v2369
      %2387 = vst.msk [vmem:[%s437 + $0x70] sm:$0xff] %vm2372, %v2370
      %2388 = vst.msk [vmem:[%s437 + $0x78] sm:$0xff] %vm2372, %v2371
      %s2389 = smul.u32 16, %s23
      %p2390 = scmp.lt.s32.totalorder %s2389, 31
      %s2391 = scalar_select %p2390, %s2389, 31
      %s2392 = smul.addr %s2391, 8
      %s2393 = scalar_lea.vmem %s12, %s2392
      // Predicated region
      $region69: #{polymer_multitask_fnn.1} parent=67 // pred_check
        %p2394 = pneg %p303
      $region70: #{polymer_multitask_fnn.1} parent=67 // pred_check_branch
        %2396 = sbr.rel (%p2394) target = $region72
      $region71: #{polymer_multitask_fnn.1} parent=67 // pred_region
        %s2397 = smul.u32 16, %s23
      $region72: #{polymer_multitask_fnn.1} parent=67 // pred_fallthru
        _
    $region68: #{polymer_multitask_fnn.1} parent=5 // pred_fallthru
      _
    %p2398 = scmp.le.s32.totalorder 2, %s18
    // Predicated region
    $region73: #{polymer_multitask_fnn.1} parent=5 // pred_check
      %p2399 = pneg %p2398
    $region74: #{polymer_multitask_fnn.1} parent=5 // pred_check_branch
      %2401 = sbr.rel (%p2399) target = $region76
    $region75: #{polymer_multitask_fnn.1} parent=5 // pred_region
      %s2402 = ssub.s32 %s18, 2
      // Predicated region
      $region77: #{polymer_multitask_fnn.1} parent=75 // pred_check
        %p2403 = pneg %p309
      $region78: #{polymer_multitask_fnn.1} parent=75 // pred_check_branch
        %2405 = sbr.rel (%p2403) target = $region80
      $region79: #{polymer_multitask_fnn.1} parent=75 // pred_region
        %s2406 = smul.u32 16, %s24
        %p2407 = scmp.lt.s32.totalorder %s2406, 31
        %s2408 = scalar_select %p2407, %s2406, 31
        %s2409 = smul.addr %s2408, 8
        %s2410 = scalar_lea.vmem %s12, %s2409
      $region80: #{polymer_multitask_fnn.1} parent=75 // pred_fallthru
        _
    $region76: #{polymer_multitask_fnn.1} parent=5 // pred_fallthru
      _
  $region6: #{polymer_multitask_fnn.1} parent=0 // loop_footer
    %s22 = sadd.s32 1, %s18
  $region7: #{polymer_multitask_fnn.1} parent=0 // loop_footer_branch
    %17 = sbr.rel target = $region3
  $region8: #{polymer_multitask_fnn.1} parent=0 // loop_exit
    _

</llo_original>
